<compile_context>
chip_gen: v7x
topology: tpu7x:2x2x1
jax: 0.10.0
libtpu: 0.0.40
codegen_flags: <defaults>
</compile_context>

<pallas_src>
import numpy as np
import jax
import jax.numpy as jnp
from jax.experimental import pallas as pl
from jax.experimental.pallas import tpu as pltpu

_VMEM_SPEC = pl.BlockSpec(memory_space=pltpu.MemorySpace.VMEM)
_WINDOW = 11
_PAD = _WINDOW // 2


def _gaussian_taps(window_size=_WINDOW, sigma=1.5):
    xs = np.arange(window_size)
    g = np.exp(-((xs - window_size // 2) ** 2) / (2.0 * sigma ** 2))
    g = g / g.sum()
    return [float(v) for v in g]


# ----------------------------------------------------------------------------
# Kernel 1: fused image loss  0.8 * L1 + 0.2 * (1 - SSIM)  for im AND seg.
# grid = (2C channels, row tiles); each step sees a zero-padded row slab of
# shape (TH+10, W+10) carrying its 5-row blur halo, and writes packed partial
# sums [l1_sum, ssim_sum] into lanes 0/1 of its (1,128) output block.
# ----------------------------------------------------------------------------
def _make_image_loss_kernel(h_total):
    taps = _gaussian_taps()

    def kernel(x_ref, y_ref, out_ref):
        xp = x_ref[...]                       # (TH+10, W+10), zero padded
        yp = y_ref[...]
        th = xp.shape[0] - 2 * _PAD
        wp = xp.shape[1]
        w = wp - 2 * _PAD
        c1 = 0.01 ** 2
        c2 = 0.03 ** 2

        # Batch the 5 SSIM blur operands -> fewer, larger VPU ops.
        stack = jnp.stack([xp * xp, yp * yp, xp * yp, xp, yp], axis=0)

        # Separable 11-tap Gaussian (matches F.conv2d(padding=5) zero padding):
        # vertical then horizontal shifted adds over the haloed slab.
        v = taps[0] * stack[:, 0:th, :]
        for a in range(1, _WINDOW):
            v = v + taps[a] * stack[:, a:a + th, :]        # (5, TH, W+10)
        b = taps[0] * v[:, :, 0:w]
        for a in range(1, _WINDOW):
            b = b + taps[a] * v[:, :, a:a + w]             # (5, TH, W)

        mu1, mu2 = b[3], b[4]
        mu1_sq = mu1 * mu1
        mu2_sq = mu2 * mu2
        mu12 = mu1 * mu2
        s1 = b[0] - mu1_sq
        s2 = b[1] - mu2_sq
        s12 = b[2] - mu12
        ssim_map = ((2.0 * mu12 + c1) * (2.0 * s12 + c2)) / (
            (mu1_sq + mu2_sq + c1) * (s1 + s2 + c2))

        # Mask rows of the (possibly over-padded) last row tile.
        t = pl.program_id(1)
        grow = jax.lax.broadcasted_iota(jnp.int32, (th, w), 0) + t * th
        valid = grow < h_total

        x_in = xp[_PAD:_PAD + th, _PAD:_PAD + w]
        y_in = yp[_PAD:_PAD + th, _PAD:_PAD + w]
        l1_sum = jnp.sum(jnp.where(valid, jnp.abs(x_in - y_in), 0.0),
                         keepdims=True)                    # (1, 1)
        ssim_sum = jnp.sum(jnp.where(valid, ssim_map, 0.0), keepdims=True)

        # Packed per-tile partial sums: lane 0 = L1, lane 1 = SSIM.
        lane = jax.lax.broadcasted_iota(jnp.int32, (1, 128), 1)
        out_ref[...] = jnp.where(lane == 0, l1_sum,
                                 jnp.where(lane == 1, ssim_sum, 0.0))

    return kernel


def image_losses(im, im_target, seg, seg_target, row_tile=128):
    """Fused 0.8*L1 + 0.2*(1-SSIM) for the rendered and segmentation images."""
    f32 = jnp.float32
    c_im, H, W = im.shape
    c_seg = seg.shape[0]
    nch = c_im + c_seg
    xs = jnp.concatenate([im, seg], axis=0).astype(f32)              # (2C, H, W)
    ys = jnp.concatenate([im_target, seg_target], axis=0).astype(f32)

    th = min(H, row_tile)
    n_rt = -(-H // th)
    hp = n_rt * th + 2 * _PAD
    wp = W + 2 * _PAD
    xs = jnp.pad(xs, ((0, 0), (_PAD, hp - _PAD - H), (_PAD, _PAD)))
    ys = jnp.pad(ys, ((0, 0), (_PAD, hp - _PAD - H), (_PAD, _PAD)))
    # Halo-materialized row slabs so BlockSpec tiles never overlap:
    # (NCH, n_rt, TH+10, W+10).
    # TODO(synk): for very large images replace this host-side slab build with
    # an in-kernel manual halo DMA (memory_space=pl.ANY + make_async_copy).
    xs = jnp.stack([xs[:, t * th:t * th + th + 2 * _PAD, :]
                    for t in range(n_rt)], axis=1)
    ys = jnp.stack([ys[:, t * th:t * th + th + 2 * _PAD, :]
                    for t in range(n_rt)], axis=1)

    slab_spec = pl.BlockSpec((None, None, th + 2 * _PAD, wp),
                             lambda c, t: (c, t, 0, 0))
    parts = pl.pallas_call(
        _make_image_loss_kernel(H),
        out_shape=jax.ShapeDtypeStruct((nch, n_rt, 1, 128), jnp.float32),
        grid=(nch, n_rt),
        in_specs=[slab_spec, slab_spec],
        out_specs=pl.BlockSpec((None, None, 1, 128), lambda c, t: (c, t, 0, 0)),
        compiler_params=pltpu.CompilerParams(
            dimension_semantics=("parallel", "parallel")),
    )(xs, ys)

    l1_c = jnp.sum(parts[:, :, 0, 0], axis=1)       # per-channel L1 sums
    ss_c = jnp.sum(parts[:, :, 0, 1], axis=1)       # per-channel SSIM sums
    n_im = float(c_im * H * W)
    n_seg = float(c_seg * H * W)
    loss_im = (0.8 * (jnp.sum(l1_c[:c_im]) / n_im) +
               0.2 * (1.0 - jnp.sum(ss_c[:c_im]) / n_im))
    loss_seg = (0.8 * (jnp.sum(l1_c[c_im:]) / n_seg) +
                0.2 * (1.0 - jnp.sum(ss_c[c_im:]) / n_seg))
    return loss_im, loss_seg


# ----------------------------------------------------------------------------
# Kernel 2: fused l1_loss_v2 terms (bg points, bg rotations, colour cons.).
# Tiny arrays -> one launch, packed (1,128) output of the three sums.
# ----------------------------------------------------------------------------
def _l1v2_fused_kernel(a_ref, a0_ref, b_ref, b0_ref, c_ref, c0_ref, out_ref):
    sa = jnp.sum(jnp.abs(a_ref[...] - a0_ref[...]), keepdims=True)
    sb = jnp.sum(jnp.abs(b_ref[...] - b0_ref[...]), keepdims=True)
    sc = jnp.sum(jnp.abs(c_ref[...] - c0_ref[...]), keepdims=True)
    lane = jax.lax.broadcasted_iota(jnp.int32, (1, 128), 1)
    out_ref[...] = jnp.where(lane == 0, sa,
                             jnp.where(lane == 1, sb,
                                       jnp.where(lane == 2, sc, 0.0)))


def bg_and_col_losses(bg_pts, init_bg_pts, bg_rot, init_bg_rot, colors, prev_col):
    f32 = jnp.float32
    args = [a.T.astype(f32) for a in
            (bg_pts, init_bg_pts, bg_rot, init_bg_rot, colors, prev_col)]
    out = pl.pallas_call(
        _l1v2_fused_kernel,
        out_shape=jax.ShapeDtypeStruct((1, 128), jnp.float32),
        in_specs=[_VMEM_SPEC] * 6,
        out_specs=_VMEM_SPEC,
    )(*args)
    nb = float(bg_pts.shape[0])
    n = float(colors.shape[0])
    bg = out[0, 0] / nb + out[0, 1] / nb
    soft_col = out[0, 2] / n
    return bg, soft_col


# ----------------------------------------------------------------------------
# Kernel 3: foreground rigid / rot / iso / floor losses.
# grid over the point axis (lanes) in tiles; inputs are feature-major
# (D, Nf) / (D, K, Nf) so all quaternion / rotation / offset math is
# lane-dense VPU work.  Packed (1,128) partial sums per tile.
# ----------------------------------------------------------------------------
def _foreground_kernel(fg_pts_ref, fg_rot_ref, pinv_ref,
                       nbr_rot_ref, nbr_pinv_ref, nbr_pts_ref,
                       prev_off_ref, w_ref, dist_ref, out_ref):
    eps = 1e-20

    def quat_mult(q1, q2):
        w1, x1, y1, z1 = q1
        w2, x2, y2, z2 = q2
        return (w1 * w2 - x1 * x2 - y1 * y2 - z1 * z2,
                w1 * x2 + x1 * w2 + y1 * z2 - z1 * y2,
                w1 * y2 - x1 * z2 + y1 * w2 + z1 * x2,
                w1 * z2 + x1 * y2 - y1 * x2 + z1 * w2)

    fq = fg_rot_ref[...]                                  # (4, TN)
    pq = pinv_ref[...]                                    # (4, TN)
    rel = quat_mult(tuple(fq[i:i + 1] for i in range(4)),
                    tuple(pq[i:i + 1] for i in range(4)))  # unnormalized

    # build_rotation: one rsqrt (EUP) + 4 VPU multiplies (was sqrt + 4 divides)
    inv_n = jax.lax.rsqrt(rel[0] * rel[0] + rel[1] * rel[1] +
                          rel[2] * rel[2] + rel[3] * rel[3])
    r = rel[0] * inv_n
    x = rel[1] * inv_n
    y = rel[2] * inv_n
    z = rel[3] * inv_n
    r00 = 1.0 - 2.0 * (y * y + z * z)
    r01 = 2.0 * (x * y - r * z)
    r02 = 2.0 * (x * z + r * y)
    r10 = 2.0 * (x * y + r * z)
    r11 = 1.0 - 2.0 * (x * x + z * z)
    r12 = 2.0 * (y * z - r * x)
    r20 = 2.0 * (x * z - r * y)
    r21 = 2.0 * (y * z + r * x)
    r22 = 1.0 - 2.0 * (x * x + y * y)

    fg = fg_pts_ref[...]                                  # (3, TN)
    off0 = nbr_pts_ref[0] - fg[0:1]                       # (K, TN)
    off1 = nbr_pts_ref[1] - fg[1:2]
    off2 = nbr_pts_ref[2] - fg[2:3]

    # curr_offset_in_prev_coord = rot^T @ curr_offset
    cip0 = r00 * off0 + r10 * off1 + r20 * off2
    cip1 = r01 * off0 + r11 * off1 + r21 * off2
    cip2 = r02 * off0 + r12 * off1 + r22 * off2

    w = w_ref[...]                                        # (K, TN)

    # rigid: weighted_l2_loss_v2(curr_offset_in_prev_coord, prev_offset, w)
    d0 = cip0 - prev_off_ref[0]
    d1 = cip1 - prev_off_ref[1]
    d2 = cip2 - prev_off_ref[2]
    rigid_s = jnp.sum(jnp.sqrt((d0 * d0 + d1 * d1 + d2 * d2) * w + eps),
                      keepdims=True)

    # rot: weighted_l2_loss_v2(rel_rot[neighbors], rel_rot[:, None], w)
    rel_n = quat_mult(tuple(nbr_rot_ref[i] for i in range(4)),
                      tuple(nbr_pinv_ref[i] for i in range(4)))  # (K, TN)
    ss = ((rel_n[0] - rel[0]) ** 2 + (rel_n[1] - rel[1]) ** 2 +
          (rel_n[2] - rel[2]) ** 2 + (rel_n[3] - rel[3]) ** 2)
    rot_s = jnp.sum(jnp.sqrt(ss * w + eps), keepdims=True)

    # iso: weighted_l2_loss_v1(|curr_offset|, neighbor_dist, w)
    mag = jnp.sqrt(off0 * off0 + off1 * off1 + off2 * off2 + eps)
    iso_s = jnp.sum(jnp.sqrt((mag - dist_ref[...]) ** 2 * w + eps),
                    keepdims=True)

    # floor: clamp(fg_pts[:, 1], min=0) sum
    floor_s = jnp.sum(jnp.maximum(fg[1:2], 0.0), keepdims=True)

    lane = jax.lax.broadcasted_iota(jnp.int32, (1, 128), 1)
    out_ref[...] = jnp.where(lane == 0, rigid_s,
                             jnp.where(lane == 1, rot_s,
                                       jnp.where(lane == 2, iso_s,
                                                 jnp.where(lane == 3, floor_s,
                                                           0.0))))


def _pick_point_tile(n):
    # largest lane-aligned tile that evenly divides n; else the full axis.
    for t in (2048, 1024, 512, 256, 128):
        if n % t == 0:
            return t
    # TODO(synk): pad the point axis to a multiple of 128 (with zero weights)
    # instead of falling back to a single full-width block.
    return n


def foreground_losses(fg_pts, fg_rot, prev_inv_rot_fg, neighbor_indices,
                      prev_offset, neighbor_weight, neighbor_dist):
    f32 = jnp.float32
    nf = fg_pts.shape[0]
    k = neighbor_indices.shape[1]

    fg_pts_t = fg_pts.T.astype(f32)                       # (3, Nf)
    fg_rot_t = fg_rot.T.astype(f32)                       # (4, Nf)
    pinv_t = prev_inv_rot_fg.T.astype(f32)                # (4, Nf)
    idx_t = neighbor_indices.T                            # (K, Nf)
    # Gathers emit feature-major layout directly (no transpose of the
    # K-expanded arrays).
    nbr_rot = fg_rot_t[:, idx_t]                          # (4, K, Nf)
    nbr_pinv = pinv_t[:, idx_t]                           # (4, K, Nf)
    nbr_pts = fg_pts_t[:, idx_t]                          # (3, K, Nf)
    # TODO(synk): store prev_offset feature-major (3, K, Nf) in `variables`
    # across timesteps to avoid this transpose pass as well.
    prev_off_t = jnp.transpose(prev_offset, (2, 1, 0)).astype(f32)
    w_t = neighbor_weight.T.astype(f32)                   # (K, Nf)
    dist_t = neighbor_dist.T.astype(f32)                  # (K, Nf)

    tile_n = _pick_point_tile(nf)
    n_tiles = nf // tile_n

    parts = pl.pallas_call(
        _foreground_kernel,
        out_shape=jax.ShapeDtypeStruct((n_tiles, 1, 128), jnp.float32),
        grid=(n_tiles,),
        in_specs=[
            pl.BlockSpec((3, tile_n), lambda t: (0, t)),
            pl.BlockSpec((4, tile_n), lambda t: (0, t)),
            pl.BlockSpec((4, tile_n), lambda t: (0, t)),
            pl.BlockSpec((4, k, tile_n), lambda t: (0, 0, t)),
            pl.BlockSpec((4, k, tile_n), lambda t: (0, 0, t)),
            pl.BlockSpec((3, k, tile_n), lambda t: (0, 0, t)),
            pl.BlockSpec((3, k, tile_n), lambda t: (0, 0, t)),
            pl.BlockSpec((k, tile_n), lambda t: (0, t)),
            pl.BlockSpec((k, tile_n), lambda t: (0, t)),
        ],
        out_specs=pl.BlockSpec((None, 1, 128), lambda t: (t, 0, 0)),
        compiler_params=pltpu.CompilerParams(
            dimension_semantics=("parallel",)),
    )(fg_pts_t, fg_rot_t, pinv_t, nbr_rot, nbr_pinv, nbr_pts,
      prev_off_t, w_t, dist_t)

    sums = jnp.sum(parts[:, 0, :4], axis=0)               # (4,)
    n_kn = float(k * nf)
    rigid = sums[0] / n_kn
    rot = sums[1] / n_kn
    iso = sums[2] / n_kn
    floor = sums[3] / float(nf)
    return rigid, rot, iso, floor


# ----------------------------------------------------------------------------
# Glue: params2rendervar + full forward
# ----------------------------------------------------------------------------
def _normalize(q, eps=1e-12):
    n = jnp.sqrt(jnp.sum(q * q, axis=-1, keepdims=True))
    return q / jnp.maximum(n, eps)


def params2rendervar(params):
    return {
        'means3D': params['means3D'],
        'colors_precomp': params['rgb_colors'],
        'rotations': _normalize(params['unnorm_rotations']),
        'opacities': jax.nn.sigmoid(params['logit_opacities']),
        'scales': jnp.exp(params['log_scales']),
        'means2D': jnp.zeros_like(params['means3D']),
    }


def deformation_loss_forward(params, curr_data, variables, is_initial_timestep,
                             rendered):
    losses = {}
    rendervar = params2rendervar(params)

    # TODO(synk): Renderer (diff-gaussian-rasterization) has no Pallas
    # equivalent; the rendered 'im', 'seg' and per-gaussian 'radius' are taken
    # as inputs instead.
    im, radius = rendered['im'], rendered['radius']
    seg = rendered['seg']
    losses['im'], losses['seg'] = image_losses(
        im, curr_data['im'], seg, curr_data['seg'])
    variables['means2D'] = rendervar['means2D']

    if not is_initial_timestep:
        is_fg = params['seg_colors'][:, 0] > 0.5
        fg_pts = rendervar['means3D'][is_fg]
        fg_rot = rendervar['rotations'][is_fg]
        rigid, rot, iso, floor = foreground_losses(
            fg_pts, fg_rot, variables['prev_inv_rot_fg'],
            variables['neighbor_indices'], variables['prev_offset'],
            variables['neighbor_weight'], variables['neighbor_dist'])
        losses['rigid'] = rigid
        losses['rot'] = rot
        losses['iso'] = iso
        losses['floor'] = floor

        bg_pts = rendervar['means3D'][~is_fg]
        bg_rot = rendervar['rotations'][~is_fg]
        losses['bg'], losses['soft_col_cons'] = bg_and_col_losses(
            bg_pts, variables['init_bg_pts'], bg_rot, variables['init_bg_rot'],
            params['rgb_colors'], variables['prev_col'])

    loss_weights = {'im': 1.0, 'seg': 3.0, 'rigid': 4.0, 'rot': 4.0, 'iso': 2.0,
                    'floor': 2.0, 'bg': 20.0, 'soft_col_cons': 0.01}
    loss = sum(loss_weights[k] * v for k, v in losses.items())

    seen = radius > 0
    variables['max_2D_radius'] = jnp.where(
        seen, jnp.maximum(radius, variables['max_2D_radius']),
        variables['max_2D_radius'])
    variables['seen'] = seen
    return loss, variables


# ----------------------------------------------------------------------------
if __name__ == "__main__":
    key = jax.random.PRNGKey(0)
    ks = jax.random.split(key, 24)
    N, Nf, K, C, H, W = 64, 32, 8, 3, 16, 16
    Nb = N - Nf

    params = {
        'means3D': jax.random.normal(ks[0], (N, 3), jnp.float32),
        'unnorm_rotations': jax.random.normal(ks[1], (N, 4), jnp.float32),
        'rgb_colors': jax.random.uniform(ks[2], (N, 3), jnp.float32),
        'logit_opacities': jax.random.normal(ks[3], (N, 1), jnp.float32),
        'log_scales': 0.1 * jax.random.normal(ks[4], (N, 3), jnp.float32),
        'seg_colors': jnp.concatenate([
            jnp.concatenate([jnp.ones((Nf, 1)), jnp.zeros((Nf, 2))], axis=1),
            jnp.zeros((Nb, 3))], axis=0).astype(jnp.float32),
    }

    curr_data = {
        'im': jax.random.uniform(ks[5], (C, H, W), jnp.float32),
        'seg': jax.random.uniform(ks[6], (C, H, W), jnp.float32),
        'cam': None,
    }

    # stand-in for the (untranslatable) rasterizer outputs
    r_raw = jax.random.uniform(ks[7], (N,), jnp.float32)
    rendered = {
        'im': jax.random.uniform(ks[8], (C, H, W), jnp.float32),
        'seg': jax.random.uniform(ks[9], (C, H, W), jnp.float32),
        'radius': jnp.where(r_raw > 0.3, r_raw * 5.0, 0.0),
    }

    variables = {
        'neighbor_indices': jax.random.randint(ks[10], (Nf, K), 0, Nf),
        'neighbor_weight': jax.random.uniform(ks[11], (Nf, K), jnp.float32),
        'neighbor_dist': jax.random.uniform(ks[12], (Nf, K), jnp.float32),
        'prev_offset': jax.random.normal(ks[13], (Nf, K, 3), jnp.float32),
        'prev_inv_rot_fg': _normalize(jax.random.normal(ks[14], (Nf, 4), jnp.float32)),
        'prev_col': jax.random.uniform(ks[15], (N, 3), jnp.float32),
        'init_bg_pts': jax.random.normal(ks[16], (Nb, 3), jnp.float32),
        'init_bg_rot': _normalize(jax.random.normal(ks[17], (Nb, 4), jnp.float32)),
        'max_2D_radius': jnp.zeros((N,), jnp.float32),
    }

    loss, variables = deformation_loss_forward(
        params, curr_data, variables, is_initial_timestep=False,
        rendered=rendered)

    loss = jax.block_until_ready(loss)
    jax.block_until_ready(variables['max_2D_radius'])
    assert bool(jnp.isfinite(loss)), "loss is not finite"
    print("KERNEL_OK")
</pallas_src>

<mosaic_0001>
module attributes {stable_mosaic.version = 11 : i64} {
  func.func @kernel(%arg0: i32, %arg1: i32, %arg2: memref<1x1x26x26xf32, #tpu.memory_space<vmem>>, %arg3: memref<1x1x26x26xf32, #tpu.memory_space<vmem>>, %arg4: memref<1x1x1x128xf32, #tpu.memory_space<vmem>>) attributes {dimension_semantics = [#tpu.dimension_semantics<parallel>, #tpu.dimension_semantics<parallel>], iteration_bounds = array<i64: 6, 1>, scalar_prefetch = 0 : i64, scratch_operands = 0 : i64, tpu.core_type = #tpu.core_type<tc>, window_params = [{transform_indices = @transform_0, window_bounds = array<i64: 1, 1, 26, 26>}, {transform_indices = @transform_1, window_bounds = array<i64: 1, 1, 26, 26>}, {transform_indices = @transform_2, window_bounds = array<i64: 1, 1, 1, 128>}]} {
    %c0 = arith.constant 0 : index
    %c0_0 = arith.constant 0 : index
    %c0_1 = arith.constant 0 : index
    %c0_2 = arith.constant 0 : index
    %0 = vector.load %arg2[%c0, %c0_0, %c0_1, %c0_2] : memref<1x1x26x26xf32, #tpu.memory_space<vmem>>, vector<1x1x26x26xf32>
    %1 = vector.shape_cast %0 : vector<1x1x26x26xf32> to vector<26x26xf32>
    %c0_3 = arith.constant 0 : index
    %c0_4 = arith.constant 0 : index
    %c0_5 = arith.constant 0 : index
    %c0_6 = arith.constant 0 : index
    %2 = vector.load %arg3[%c0_3, %c0_4, %c0_5, %c0_6] : memref<1x1x26x26xf32, #tpu.memory_space<vmem>>, vector<1x1x26x26xf32>
    %3 = vector.shape_cast %2 : vector<1x1x26x26xf32> to vector<26x26xf32>
    %4 = arith.mulf %1, %1 : vector<26x26xf32>
    %5 = arith.mulf %3, %3 : vector<26x26xf32>
    %6 = arith.mulf %1, %3 : vector<26x26xf32>
    %7 = vector.shape_cast %4 : vector<26x26xf32> to vector<1x26x26xf32>
    %8 = vector.shape_cast %5 : vector<26x26xf32> to vector<1x26x26xf32>
    %9 = vector.shape_cast %6 : vector<26x26xf32> to vector<1x26x26xf32>
    %10 = vector.shape_cast %1 : vector<26x26xf32> to vector<1x26x26xf32>
    %11 = vector.shape_cast %3 : vector<26x26xf32> to vector<1x26x26xf32>
    %12 = tpu.concatenate %7, %8, %9, %10, %11 in 0 : vector<1x26x26xf32>, vector<1x26x26xf32>, vector<1x26x26xf32>, vector<1x26x26xf32>, vector<1x26x26xf32> -> vector<5x26x26xf32>
    %13 = vector.extract_strided_slice %12 {offsets = [0, 0, 0], sizes = [5, 16, 26], strides = [1, 1, 1]} : vector<5x26x26xf32> to vector<5x16x26xf32>
    %cst = arith.constant 0.00102838012 : f32
    %14 = vector.broadcast %cst : f32 to vector<5x16x26xf32>
    %15 = arith.mulf %14, %13 : vector<5x16x26xf32>
    %16 = vector.extract_strided_slice %12 {offsets = [0, 1, 0], sizes = [5, 16, 26], strides = [1, 1, 1]} : vector<5x26x26xf32> to vector<5x16x26xf32>
    %cst_7 = arith.constant 0.00759875821 : f32
    %17 = vector.broadcast %cst_7 : f32 to vector<5x16x26xf32>
    %18 = arith.mulf %17, %16 : vector<5x16x26xf32>
    %19 = arith.addf %15, %18 : vector<5x16x26xf32>
    %20 = vector.extract_strided_slice %12 {offsets = [0, 2, 0], sizes = [5, 16, 26], strides = [1, 1, 1]} : vector<5x26x26xf32> to vector<5x16x26xf32>
    %cst_8 = arith.constant 0.0360007733 : f32
    %21 = vector.broadcast %cst_8 : f32 to vector<5x16x26xf32>
    %22 = arith.mulf %21, %20 : vector<5x16x26xf32>
    %23 = arith.addf %19, %22 : vector<5x16x26xf32>
    %24 = vector.extract_strided_slice %12 {offsets = [0, 3, 0], sizes = [5, 16, 26], strides = [1, 1, 1]} : vector<5x26x26xf32> to vector<5x16x26xf32>
    %cst_9 = arith.constant 0.109360687 : f32
    %25 = vector.broadcast %cst_9 : f32 to vector<5x16x26xf32>
    %26 = arith.mulf %25, %24 : vector<5x16x26xf32>
    %27 = arith.addf %23, %26 : vector<5x16x26xf32>
    %28 = vector.extract_strided_slice %12 {offsets = [0, 4, 0], sizes = [5, 16, 26], strides = [1, 1, 1]} : vector<5x26x26xf32> to vector<5x16x26xf32>
    %cst_10 = arith.constant 0.213005543 : f32
    %29 = vector.broadcast %cst_10 : f32 to vector<5x16x26xf32>
    %30 = arith.mulf %29, %28 : vector<5x16x26xf32>
    %31 = arith.addf %27, %30 : vector<5x16x26xf32>
    %32 = vector.extract_strided_slice %12 {offsets = [0, 5, 0], sizes = [5, 16, 26], strides = [1, 1, 1]} : vector<5x26x26xf32> to vector<5x16x26xf32>
    %cst_11 = arith.constant 0.266011715 : f32
    %33 = vector.broadcast %cst_11 : f32 to vector<5x16x26xf32>
    %34 = arith.mulf %33, %32 : vector<5x16x26xf32>
    %35 = arith.addf %31, %34 : vector<5x16x26xf32>
    %36 = vector.extract_strided_slice %12 {offsets = [0, 6, 0], sizes = [5, 16, 26], strides = [1, 1, 1]} : vector<5x26x26xf32> to vector<5x16x26xf32>
    %cst_12 = arith.constant 0.213005543 : f32
    %37 = vector.broadcast %cst_12 : f32 to vector<5x16x26xf32>
    %38 = arith.mulf %37, %36 : vector<5x16x26xf32>
    %39 = arith.addf %35, %38 : vector<5x16x26xf32>
    %40 = vector.extract_strided_slice %12 {offsets = [0, 7, 0], sizes = [5, 16, 26], strides = [1, 1, 1]} : vector<5x26x26xf32> to vector<5x16x26xf32>
    %cst_13 = arith.constant 0.109360687 : f32
    %41 = vector.broadcast %cst_13 : f32 to vector<5x16x26xf32>
    %42 = arith.mulf %41, %40 : vector<5x16x26xf32>
    %43 = arith.addf %39, %42 : vector<5x16x26xf32>
    %44 = vector.extract_strided_slice %12 {offsets = [0, 8, 0], sizes = [5, 16, 26], strides = [1, 1, 1]} : vector<5x26x26xf32> to vector<5x16x26xf32>
    %cst_14 = arith.constant 0.0360007733 : f32
    %45 = vector.broadcast %cst_14 : f32 to vector<5x16x26xf32>
    %46 = arith.mulf %45, %44 : vector<5x16x26xf32>
    %47 = arith.addf %43, %46 : vector<5x16x26xf32>
    %48 = vector.extract_strided_slice %12 {offsets = [0, 9, 0], sizes = [5, 16, 26], strides = [1, 1, 1]} : vector<5x26x26xf32> to vector<5x16x26xf32>
    %cst_15 = arith.constant 0.00759875821 : f32
    %49 = vector.broadcast %cst_15 : f32 to vector<5x16x26xf32>
    %50 = arith.mulf %49, %48 : vector<5x16x26xf32>
    %51 = arith.addf %47, %50 : vector<5x16x26xf32>
    %52 = vector.extract_strided_slice %12 {offsets = [0, 10, 0], sizes = [5, 16, 26], strides = [1, 1, 1]} : vector<5x26x26xf32> to vector<5x16x26xf32>
    %cst_16 = arith.constant 0.00102838012 : f32
    %53 = vector.broadcast %cst_16 : f32 to vector<5x16x26xf32>
    %54 = arith.mulf %53, %52 : vector<5x16x26xf32>
    %55 = arith.addf %51, %54 : vector<5x16x26xf32>
    %56 = vector.extract_strided_slice %55 {offsets = [0, 0, 0], sizes = [5, 16, 16], strides = [1, 1, 1]} : vector<5x16x26xf32> to vector<5x16x16xf32>
    %cst_17 = arith.constant 0.00102838012 : f32
    %57 = vector.broadcast %cst_17 : f32 to vector<5x16x16xf32>
    %58 = arith.mulf %57, %56 : vector<5x16x16xf32>
    %59 = vector.extract_strided_slice %55 {offsets = [0, 0, 1], sizes = [5, 16, 16], strides = [1, 1, 1]} : vector<5x16x26xf32> to vector<5x16x16xf32>
    %cst_18 = arith.constant 0.00759875821 : f32
    %60 = vector.broadcast %cst_18 : f32 to vector<5x16x16xf32>
    %61 = arith.mulf %60, %59 : vector<5x16x16xf32>
    %62 = arith.addf %58, %61 : vector<5x16x16xf32>
    %63 = vector.extract_strided_slice %55 {offsets = [0, 0, 2], sizes = [5, 16, 16], strides = [1, 1, 1]} : vector<5x16x26xf32> to vector<5x16x16xf32>
    %cst_19 = arith.constant 0.0360007733 : f32
    %64 = vector.broadcast %cst_19 : f32 to vector<5x16x16xf32>
    %65 = arith.mulf %64, %63 : vector<5x16x16xf32>
    %66 = arith.addf %62, %65 : vector<5x16x16xf32>
    %67 = vector.extract_strided_slice %55 {offsets = [0, 0, 3], sizes = [5, 16, 16], strides = [1, 1, 1]} : vector<5x16x26xf32> to vector<5x16x16xf32>
    %cst_20 = arith.constant 0.109360687 : f32
    %68 = vector.broadcast %cst_20 : f32 to vector<5x16x16xf32>
    %69 = arith.mulf %68, %67 : vector<5x16x16xf32>
    %70 = arith.addf %66, %69 : vector<5x16x16xf32>
    %71 = vector.extract_strided_slice %55 {offsets = [0, 0, 4], sizes = [5, 16, 16], strides = [1, 1, 1]} : vector<5x16x26xf32> to vector<5x16x16xf32>
    %cst_21 = arith.constant 0.213005543 : f32
    %72 = vector.broadcast %cst_21 : f32 to vector<5x16x16xf32>
    %73 = arith.mulf %72, %71 : vector<5x16x16xf32>
    %74 = arith.addf %70, %73 : vector<5x16x16xf32>
    %75 = vector.extract_strided_slice %55 {offsets = [0, 0, 5], sizes = [5, 16, 16], strides = [1, 1, 1]} : vector<5x16x26xf32> to vector<5x16x16xf32>
    %cst_22 = arith.constant 0.266011715 : f32
    %76 = vector.broadcast %cst_22 : f32 to vector<5x16x16xf32>
    %77 = arith.mulf %76, %75 : vector<5x16x16xf32>
    %78 = arith.addf %74, %77 : vector<5x16x16xf32>
    %79 = vector.extract_strided_slice %55 {offsets = [0, 0, 6], sizes = [5, 16, 16], strides = [1, 1, 1]} : vector<5x16x26xf32> to vector<5x16x16xf32>
    %cst_23 = arith.constant 0.213005543 : f32
    %80 = vector.broadcast %cst_23 : f32 to vector<5x16x16xf32>
    %81 = arith.mulf %80, %79 : vector<5x16x16xf32>
    %82 = arith.addf %78, %81 : vector<5x16x16xf32>
    %83 = vector.extract_strided_slice %55 {offsets = [0, 0, 7], sizes = [5, 16, 16], strides = [1, 1, 1]} : vector<5x16x26xf32> to vector<5x16x16xf32>
    %cst_24 = arith.constant 0.109360687 : f32
    %84 = vector.broadcast %cst_24 : f32 to vector<5x16x16xf32>
    %85 = arith.mulf %84, %83 : vector<5x16x16xf32>
    %86 = arith.addf %82, %85 : vector<5x16x16xf32>
    %87 = vector.extract_strided_slice %55 {offsets = [0, 0, 8], sizes = [5, 16, 16], strides = [1, 1, 1]} : vector<5x16x26xf32> to vector<5x16x16xf32>
    %cst_25 = arith.constant 0.0360007733 : f32
    %88 = vector.broadcast %cst_25 : f32 to vector<5x16x16xf32>
    %89 = arith.mulf %88, %87 : vector<5x16x16xf32>
    %90 = arith.addf %86, %89 : vector<5x16x16xf32>
    %91 = vector.extract_strided_slice %55 {offsets = [0, 0, 9], sizes = [5, 16, 16], strides = [1, 1, 1]} : vector<5x16x26xf32> to vector<5x16x16xf32>
    %cst_26 = arith.constant 0.00759875821 : f32
    %92 = vector.broadcast %cst_26 : f32 to vector<5x16x16xf32>
    %93 = arith.mulf %92, %91 : vector<5x16x16xf32>
    %94 = arith.addf %90, %93 : vector<5x16x16xf32>
    %95 = vector.extract_strided_slice %55 {offsets = [0, 0, 10], sizes = [5, 16, 16], strides = [1, 1, 1]} : vector<5x16x26xf32> to vector<5x16x16xf32>
    %cst_27 = arith.constant 0.00102838012 : f32
    %96 = vector.broadcast %cst_27 : f32 to vector<5x16x16xf32>
    %97 = arith.mulf %96, %95 : vector<5x16x16xf32>
    %98 = arith.addf %94, %97 : vector<5x16x16xf32>
    %99 = vector.extract_strided_slice %98 {offsets = [3, 0, 0], sizes = [1, 16, 16], strides = [1, 1, 1]} : vector<5x16x16xf32> to vector<1x16x16xf32>
    %100 = vector.shape_cast %99 : vector<1x16x16xf32> to vector<16x16xf32>
    %101 = vector.extract_strided_slice %98 {offsets = [4, 0, 0], sizes = [1, 16, 16], strides = [1, 1, 1]} : vector<5x16x16xf32> to vector<1x16x16xf32>
    %102 = vector.shape_cast %101 : vector<1x16x16xf32> to vector<16x16xf32>
    %103 = arith.mulf %100, %100 : vector<16x16xf32>
    %104 = arith.mulf %102, %102 : vector<16x16xf32>
    %105 = arith.mulf %100, %102 : vector<16x16xf32>
    %106 = vector.extract_strided_slice %98 {offsets = [0, 0, 0], sizes = [1, 16, 16], strides = [1, 1, 1]} : vector<5x16x16xf32> to vector<1x16x16xf32>
    %107 = vector.shape_cast %106 : vector<1x16x16xf32> to vector<16x16xf32>
    %108 = arith.subf %107, %103 : vector<16x16xf32>
    %109 = vector.extract_strided_slice %98 {offsets = [1, 0, 0], sizes = [1, 16, 16], strides = [1, 1, 1]} : vector<5x16x16xf32> to vector<1x16x16xf32>
    %110 = vector.shape_cast %109 : vector<1x16x16xf32> to vector<16x16xf32>
    %111 = arith.subf %110, %104 : vector<16x16xf32>
    %112 = vector.extract_strided_slice %98 {offsets = [2, 0, 0], sizes = [1, 16, 16], strides = [1, 1, 1]} : vector<5x16x16xf32> to vector<1x16x16xf32>
    %113 = vector.shape_cast %112 : vector<1x16x16xf32> to vector<16x16xf32>
    %114 = arith.subf %113, %105 : vector<16x16xf32>
    %cst_28 = arith.constant 2.000000e+00 : f32
    %115 = vector.broadcast %cst_28 : f32 to vector<16x16xf32>
    %116 = arith.mulf %115, %105 : vector<16x16xf32>
    %cst_29 = arith.constant 9.99999974E-5 : f32
    %117 = vector.broadcast %cst_29 : f32 to vector<16x16xf32>
    %118 = arith.addf %116, %117 : vector<16x16xf32>
    %cst_30 = arith.constant 2.000000e+00 : f32
    %119 = vector.broadcast %cst_30 : f32 to vector<16x16xf32>
    %120 = arith.mulf %119, %114 : vector<16x16xf32>
    %cst_31 = arith.constant 8.99999984E-4 : f32
    %121 = vector.broadcast %cst_31 : f32 to vector<16x16xf32>
    %122 = arith.addf %120, %121 : vector<16x16xf32>
    %123 = arith.mulf %118, %122 : vector<16x16xf32>
    %124 = arith.addf %103, %104 : vector<16x16xf32>
    %cst_32 = arith.constant 9.99999974E-5 : f32
    %125 = vector.broadcast %cst_32 : f32 to vector<16x16xf32>
    %126 = arith.addf %124, %125 : vector<16x16xf32>
    %127 = arith.addf %108, %111 : vector<16x16xf32>
    %cst_33 = arith.constant 8.99999984E-4 : f32
    %128 = vector.broadcast %cst_33 : f32 to vector<16x16xf32>
    %129 = arith.addf %127, %128 : vector<16x16xf32>
    %130 = arith.mulf %126, %129 : vector<16x16xf32>
    %131 = arith.divf %123, %130 : vector<16x16xf32>
    %132 = tpu.iota {dimensions = array<i32: 0>} : vector<16x16xi32>
    %c16_i32 = arith.constant 16 : i32
    %133 = arith.muli %arg1, %c16_i32 : i32
    %134 = vector.broadcast %133 : i32 to vector<16x16xi32>
    %135 = arith.addi %132, %134 : vector<16x16xi32>
    %c16_i32_34 = arith.constant 16 : i32
    %136 = vector.broadcast %c16_i32_34 : i32 to vector<16x16xi32>
    %137 = arith.cmpi slt, %135, %136 : vector<16x16xi32>
    %138 = vector.extract_strided_slice %1 {offsets = [5, 5], sizes = [16, 16], strides = [1, 1]} : vector<26x26xf32> to vector<16x16xf32>
    %139 = vector.extract_strided_slice %3 {offsets = [5, 5], sizes = [16, 16], strides = [1, 1]} : vector<26x26xf32> to vector<16x16xf32>
    %140 = arith.subf %138, %139 : vector<16x16xf32>
    %141 = math.absf %140 : vector<16x16xf32>
    %cst_35 = arith.constant 0.000000e+00 : f32
    %142 = vector.broadcast %cst_35 : f32 to vector<16x16xf32>
    %143 = arith.select %137, %141, %142 : vector<16x16xi1>, vector<16x16xf32>
    %144 = vector.shape_cast %143 : vector<16x16xf32> to vector<1x16x16xf32>
    %cst_36 = arith.constant dense<0.000000e+00> : vector<1xf32>
    %145 = vector.multi_reduction <add>, %144, %cst_36 [1, 2] : vector<1x16x16xf32> to vector<1xf32>
    %146 = vector.shape_cast %145 : vector<1xf32> to vector<1x1x1xf32>
    %147 = vector.extract %146[0, 0, 0] : f32 from vector<1x1x1xf32>
    %148 = vector.broadcast %147 : f32 to vector<1x1xf32>
    %cst_37 = arith.constant 0.000000e+00 : f32
    %149 = vector.broadcast %cst_37 : f32 to vector<16x16xf32>
    %150 = arith.select %137, %131, %149 : vector<16x16xi1>, vector<16x16xf32>
    %151 = vector.shape_cast %150 : vector<16x16xf32> to vector<1x16x16xf32>
    %cst_38 = arith.constant dense<0.000000e+00> : vector<1xf32>
    %152 = vector.multi_reduction <add>, %151, %cst_38 [1, 2] : vector<1x16x16xf32> to vector<1xf32>
    %153 = vector.shape_cast %152 : vector<1xf32> to vector<1x1x1xf32>
    %154 = vector.extract %153[0, 0, 0] : f32 from vector<1x1x1xf32>
    %155 = vector.broadcast %154 : f32 to vector<1x1xf32>
    %156 = tpu.iota {dimensions = array<i32: 1>} : vector<1x128xi32>
    %c0_i32 = arith.constant 0 : i32
    %157 = vector.broadcast %c0_i32 : i32 to vector<1x128xi32>
    %158 = arith.cmpi eq, %156, %157 : vector<1x128xi32>
    %c1_i32 = arith.constant 1 : i32
    %159 = vector.broadcast %c1_i32 : i32 to vector<1x128xi32>
    %160 = arith.cmpi eq, %156, %159 : vector<1x128xi32>
    %cst_39 = arith.constant 0.000000e+00 : f32
    %161 = vector.shape_cast %155 : vector<1x1xf32> to vector<1x1xf32>
    %162 = vector.broadcast %161 : vector<1x1xf32> to vector<1x128xf32>
    %163 = vector.broadcast %cst_39 : f32 to vector<1x128xf32>
    %164 = arith.select %160, %162, %163 : vector<1x128xi1>, vector<1x128xf32>
    %165 = vector.shape_cast %148 : vector<1x1xf32> to vector<1x1xf32>
    %166 = vector.broadcast %165 : vector<1x1xf32> to vector<1x128xf32>
    %167 = arith.select %158, %166, %164 : vector<1x128xi1>, vector<1x128xf32>
    %c0_40 = arith.constant 0 : index
    %c0_41 = arith.constant 0 : index
    %c0_42 = arith.constant 0 : index
    %c0_43 = arith.constant 0 : index
    %168 = vector.load %arg4[%c0_40, %c0_41, %c0_42, %c0_43] : memref<1x1x1x128xf32, #tpu.memory_space<vmem>>, vector<1x1x1x128xf32>
    %169 = vector.shape_cast %168 : vector<1x1x1x128xf32> to vector<1x128xf32>
    %170 = vector.shape_cast %167 : vector<1x128xf32> to vector<1x1x1x128xf32>
    tpu.vector_store %arg4[%c0_40, %c0_41, %c0_42, %c0_43], %170 {strides = array<i32>} : memref<1x1x1x128xf32, #tpu.memory_space<vmem>>, vector<1x1x1x128xf32>,
    return
  }
  func.func @transform_0(%arg0: i32, %arg1: i32) -> (i32, i32, i32, i32) {
    %c0_i32 = arith.constant 0 : i32
    %c0_i32_0 = arith.constant 0 : i32
    %c0_i32_1 = arith.constant 0 : i32
    return %arg0, %arg1, %c0_i32, %c0_i32_0 : i32, i32, i32, i32
  }
  func.func @transform_1(%arg0: i32, %arg1: i32) -> (i32, i32, i32, i32) {
    %c0_i32 = arith.constant 0 : i32
    %c0_i32_0 = arith.constant 0 : i32
    %c0_i32_1 = arith.constant 0 : i32
    return %arg0, %arg1, %c0_i32, %c0_i32_0 : i32, i32, i32, i32
  }
  func.func @transform_2(%arg0: i32, %arg1: i32) -> (i32, i32, i32, i32) {
    %c0_i32 = arith.constant 0 : i32
    %c0_i32_0 = arith.constant 0 : i32
    %c0_i32_1 = arith.constant 0 : i32
    return %arg0, %arg1, %c0_i32, %c0_i32_0 : i32, i32, i32, i32
  }
}

</mosaic_0001>

<llo_original>
// kernel: tpu_custom_call.1
$region0: #{tpu_custom_call.1}
  #allocation0 [shape = 'u32[]', space=smem, size = 0x4, offset = 0x4, fixed_abs, tag = 'smem constant byte address 0x4 - core index']
  #allocation1 [shape = 'u32[144,128]{1,0:T(1,128)}', space=vmem, size = 0x12000, scoped, tag = 'internal scratch']
  %s0 = inlined_call_operand.vmem [shape: f32[6,1,26,26], index: 0, kind: input, shape index: {}]
  %s1 = inlined_call_operand.vmem [shape: f32[6,1,26,26], index: 1, kind: input, shape index: {}]
  %s2 = inlined_call_operand.hbm [shape: f32[6,1,1,128], index: 2, kind: output, shape index: {}]
  %s3 = sld [smem:[#allocation0]]
  $region41: #{tpu_custom_call.1} parent=0
    _
  %s5 = ssub.s32 1, %s3
  %s6 = scalar_select 0, %s5, %s3
  $region1: #{tpu_custom_call.1} parent=0
    #allocation2 [shape = 'u8[1024]{0}', space=vmem, size = 0x400, scoped, tag = 'output window, operand 0']
    #allocation3 [shape = 's32[2]{0}', space=sflag, size = 0x8, scoped, tag = 'scoped memory for tpu_custom_call.1']
    %7 = vsyncpa [#allocation3], 0
    %s8 = scalar_lea.sflag [#allocation3], 1
    %9 = vsyncpa %s8, 0
    loop: start=0, step=1, limit=8
    $region2: #{tpu_custom_call.1} parent=1 // loop_pre_header
      _
    $region3: #{tpu_custom_call.1} parent=1 // loop_header
      %s11 = sphi 0, %s15
      %p12 = scmp.ge.s32.totalorder %s11, 8
      %s18 = sphi 0, %s30
      %s19 = sphi 0, %s26
      %s20 = sphi 0, %s18
      %s21 = sphi 0, %s19
      %s22 = sphi 0, %s20
      %s23 = sphi 0, %s21
      %s35 = sphi 0, %s37
      %s38 = sphi 0, %s35
      %s39 = sphi 0, %s38
      %s55 = sphi 0, %s39
      %s63 = sphi 0, %s65
      %s66 = sphi 0, %s63
      %s67 = sphi 0, %s66
      %s83 = sphi 0, %s67
      %s91 = sphi 0, %s93
      %s94 = sphi 0, %s91
      %s95 = sphi 0, %s94
      %s111 = sphi 0, %s95
    $region4: #{tpu_custom_call.1} parent=1 // loop_header_branch
      %14 = sbr.rel (%p12) target = $region8
    $region5: #{tpu_custom_call.1} parent=1 // loop_body
      %s16 = ssub.s32 %s11, 1
      %s17 = ssub.s32 %s11, 2
      %s24 = sadd.s32 1, %s19
      %p25 = scmp.ge.s32.totalorder %s24, 1
      %s26 = scalar_select %p25, 0, %s24
      %s27 = sadd.s32 1, %s18
      %s28 = scalar_select %p25, %s27, %s18
      %p29 = scmp.ge.s32.totalorder %s28, 6
      %s30 = scalar_select %p29, 0, %s28
      %s31 = ssub.s32 %s18, %s30
      %s32 = ssub.s32 %s19, %s26
      %s33 = sor.u32 %s31, %s32
      %p34 = scmp.eq.s32.totalorder %s33, 0
      %s36 = sadd.s32 %s35, 1
      %s37 = scalar_select %p34, %s35, %s36
      %p40 = pneg %p34
      %p41 = scmp.eq.s32.totalorder %s11, 5
      %p42 = por %p40, %p41
      %p43 = scmp.ne.s32.totalorder %s35, %s38
      %p44 = scmp.eq.s32.totalorder %s11, 0
      %p45 = por %p43, %p44
      %p46 = scmp.ne.s32.totalorder %s35, %s38
      %p47 = scmp.eq.s32.totalorder %s16, 5
      %p48 = por %p46, %p47
      %p49 = scmp.ne.s32.totalorder %s38, %s39
      %p50 = scmp.eq.s32.totalorder %s16, 0
      %p51 = por %p49, %p50
      %p52 = scmp.ne.s32.totalorder %s38, %s39
      %p53 = scmp.eq.s32.totalorder %s17, 5
      %p54 = por %p52, %p53
      %p56 = scmp.ne.s32.totalorder %s39, %s55
      %p57 = scmp.eq.s32.totalorder %s17, 0
      %p58 = por %p56, %p57
      %s59 = ssub.s32 %s18, %s30
      %s60 = ssub.s32 %s19, %s26
      %s61 = sor.u32 %s59, %s60
      %p62 = scmp.eq.s32.totalorder %s61, 0
      %s64 = sadd.s32 %s63, 1
      %s65 = scalar_select %p62, %s63, %s64
      %p68 = pneg %p62
      %p69 = scmp.eq.s32.totalorder %s11, 5
      %p70 = por %p68, %p69
      %p71 = scmp.ne.s32.totalorder %s63, %s66
      %p72 = scmp.eq.s32.totalorder %s11, 0
      %p73 = por %p71, %p72
      %p74 = scmp.ne.s32.totalorder %s63, %s66
      %p75 = scmp.eq.s32.totalorder %s16, 5
      %p76 = por %p74, %p75
      %p77 = scmp.ne.s32.totalorder %s66, %s67
      %p78 = scmp.eq.s32.totalorder %s16, 0
      %p79 = por %p77, %p78
      %p80 = scmp.ne.s32.totalorder %s66, %s67
      %p81 = scmp.eq.s32.totalorder %s17, 5
      %p82 = por %p80, %p81
      %p84 = scmp.ne.s32.totalorder %s67, %s83
      %p85 = scmp.eq.s32.totalorder %s17, 0
      %p86 = por %p84, %p85
      %s87 = ssub.s32 %s18, %s30
      %s88 = ssub.s32 %s19, %s26
      %s89 = sor.u32 %s87, %s88
      %p90 = scmp.eq.s32.totalorder %s89, 0
      %s92 = sadd.s32 %s91, 1
      %s93 = scalar_select %p90, %s91, %s92
      %p96 = pneg %p90
      %p97 = scmp.eq.s32.totalorder %s11, 5
      %p98 = por %p96, %p97
      %p99 = scmp.ne.s32.totalorder %s91, %s94
      %p100 = scmp.eq.s32.totalorder %s11, 0
      %p101 = por %p99, %p100
      %p102 = scmp.ne.s32.totalorder %s91, %s94
      %p103 = scmp.eq.s32.totalorder %s16, 5
      %p104 = por %p102, %p103
      %p105 = scmp.ne.s32.totalorder %s94, %s95
      %p106 = scmp.eq.s32.totalorder %s16, 0
      %p107 = por %p105, %p106
      %p108 = scmp.ne.s32.totalorder %s94, %s95
      %p109 = scmp.eq.s32.totalorder %s17, 5
      %p110 = por %p108, %p109
      %p112 = scmp.ne.s32.totalorder %s95, %s111
      %p113 = scmp.eq.s32.totalorder %s17, 0
      %p114 = por %p112, %p113
      %p115 = scmp.le.s32.totalorder 1, %s11
      %p116 = scmp.lt.s32.totalorder %s11, 7
      %p117 = pnand %p115, %p116
      %p118 = pneg %p117
      // Predicated region
      $region9: #{tpu_custom_call.1} parent=5 // pred_check
        _
      $region10: #{tpu_custom_call.1} parent=5 // pred_check_branch
        %120 = sbr.rel (%p117) target = $region12
      $region11: #{tpu_custom_call.1} parent=5 // pred_region
        %s121 = ssub.s32 %s11, 1
      $region12: #{tpu_custom_call.1} parent=5 // pred_fallthru
        _
      %p122 = scmp.lt.s32.totalorder %s11, 6
      // Predicated region
      $region13: #{tpu_custom_call.1} parent=5 // pred_check
        %p123 = pneg %p122
      $region14: #{tpu_custom_call.1} parent=5 // pred_check_branch
        %125 = sbr.rel (%p123) target = $region16
      $region15: #{tpu_custom_call.1} parent=5 // pred_region
        // Predicated region
        $region17: #{tpu_custom_call.1} parent=15 // pred_check
          %p126 = pneg %p45
        $region18: #{tpu_custom_call.1} parent=15 // pred_check_branch
          %128 = sbr.rel (%p126) target = $region20
        $region19: #{tpu_custom_call.1} parent=15 // pred_region
          %p129 = scmp.lt.s32.totalorder %s18, 5
          %s130 = scalar_select %p129, %s18, 5
          %p131 = scmp.lt.s32.totalorder %s19, 0
          %s132 = scalar_select %p131, %s19, 0
          %s133 = smul.addr %s132, 4
          %s134 = smul.addr %s130, 4
          %s135 = sadd.s32 %s133, %s134
          %s136 = smul.addr %s135, 8
          %s137 = scalar_lea.vmem %s0, %s136
        $region20: #{tpu_custom_call.1} parent=15 // pred_fallthru
          _
        // Predicated region
        $region21: #{tpu_custom_call.1} parent=15 // pred_check
          %p138 = pneg %p73
        $region22: #{tpu_custom_call.1} parent=15 // pred_check_branch
          %140 = sbr.rel (%p138) target = $region24
        $region23: #{tpu_custom_call.1} parent=15 // pred_region
          %p141 = scmp.lt.s32.totalorder %s18, 5
          %s142 = scalar_select %p141, %s18, 5
          %p143 = scmp.lt.s32.totalorder %s19, 0
          %s144 = scalar_select %p143, %s19, 0
          %s145 = smul.addr %s144, 4
          %s146 = smul.addr %s142, 4
          %s147 = sadd.s32 %s145, %s146
          %s148 = smul.addr %s147, 8
          %s149 = scalar_lea.vmem %s1, %s148
        $region24: #{tpu_custom_call.1} parent=15 // pred_fallthru
          _
      $region16: #{tpu_custom_call.1} parent=5 // pred_fallthru
        _
      %p150 = scmp.le.s32.totalorder 1, %s11
      %p151 = scmp.lt.s32.totalorder %s11, 7
      %p152 = pnand %p150, %p151
      %p153 = pneg %p152
      // Predicated region
      $region25: #{tpu_custom_call.1} parent=5 // pred_check
        _
      $region26: #{tpu_custom_call.1} parent=5 // pred_check_branch
        %155 = sbr.rel (%p152) target = $region28
      $region27: #{tpu_custom_call.1} parent=5 // pred_region
        %s156 = ssub.s32 %s11, 1
        %p157 = scmp.lt.s32.totalorder %s20, 5
        %s158 = scalar_select %p157, %s20, 5
        %p159 = scmp.lt.s32.totalorder %s21, 0
        %s160 = scalar_select %p159, %s21, 0
        %s161 = smul.addr %s160, 4
        %s162 = smul.addr %s158, 4
        %s163 = sadd.s32 %s161, %s162
        %s164 = smul.addr %s163, 8
        %s165 = scalar_lea.vmem %s0, %s164
        %p166 = pneg %p51
        %p167 = pneg %p48
        %p168 = scmp.lt.s32.totalorder %s20, 5
        %s169 = scalar_select %p168, %s20, 5
        %p170 = scmp.lt.s32.totalorder %s21, 0
        %s171 = scalar_select %p170, %s21, 0
        %s172 = smul.addr %s171, 4
        %s173 = smul.addr %s169, 4
        %s174 = sadd.s32 %s172, %s173
        %s175 = smul.addr %s174, 8
        %s176 = scalar_lea.vmem %s1, %s175
        %p177 = pneg %p79
        %p178 = pneg %p76
        %p179 = pneg %p107
        %p180 = pneg %p104
        %s181 = sand.u32 %s94, 1
        %s182 = scalar_lea.sflag [#allocation3], %s181
        %s183 = sand.u32 %s94, 1
        %s184 = scalar_lea.vmem [#allocation2], %s183
        %p185 = scmp.lt.s32.totalorder %s20, 5
        %s186 = scalar_select %p185, %s20, 5
        %p187 = scmp.lt.s32.totalorder %s21, 0
        %s188 = scalar_select %p187, %s21, 0
        %s189 = smul.addr %s188, 4
        %s190 = smul.addr %s186, 4
        %s191 = sadd.s32 %s189, %s190
        %s192 = smul.addr %s191, 8
        %s193 = scalar_lea.vmem %s0, %s192
        %p194 = scmp.lt.s32.totalorder %s20, 5
        %s195 = scalar_select %p194, %s20, 5
        %p196 = scmp.lt.s32.totalorder %s21, 0
        %s197 = scalar_select %p196, %s21, 0
        %s198 = smul.addr %s197, 4
        %s199 = smul.addr %s195, 4
        %s200 = sadd.s32 %s198, %s199
        %s201 = smul.addr %s200, 8
        %s202 = scalar_lea.vmem %s1, %s201
        %v203 = vld [vmem:[%s193] sm:$0xff]
        %v204 = vld [vmem:[%s193 + $0x8] sm:$0xff]
        %v205 = vld [vmem:[%s193 + $0x10] sm:$0xff]
        %v206 = vld [vmem:[%s193 + $0x18] sm:$0x3]
        %v207 = vld [vmem:[%s202] sm:$0xff]
        %v208 = vld [vmem:[%s202 + $0x8] sm:$0xff]
        %v209 = vld [vmem:[%s202 + $0x10] sm:$0xff]
        %v210 = vld [vmem:[%s202 + $0x18] sm:$0x3]
        %v211 = vmul.f32 %v203, %v203
        %v212 = vmul.f32 %v204, %v204
        %v213 = vmul.f32 %v205, %v205
        %v214 = vmul.f32 %v206, %v206
        %v215 = vmul.f32 %v207, %v207
        %v216 = vmul.f32 %v208, %v208
        %v217 = vmul.f32 %v209, %v209
        %v218 = vmul.f32 %v210, %v210
        %v219 = vmul.f32 %v203, %v207
        %v220 = vmul.f32 %v204, %v208
        %v221 = vmul.f32 %v205, %v209
        %v222 = vmul.f32 %v206, %v210
        %v223 = vmul.f32 %v211, 0.0010283801
        %v224 = vmul.f32 %v212, 0.0010283801
        %v225 = vmul.f32 %v215, 0.0010283801
        %v226 = vmul.f32 %v216, 0.0010283801
        %v227 = vmul.f32 %v219, 0.0010283801
        %v228 = vmul.f32 %v220, 0.0010283801
        %v229 = vmul.f32 %v203, 0.0010283801
        %v230 = vmul.f32 %v204, 0.0010283801
        %v231 = vmul.f32 %v207, 0.0010283801
        %v232 = vmul.f32 %v208, 0.0010283801
        %v233 = vmul.f32 %v211, 0.007598758
        %v234 = vmul.f32 %v212, 0.007598758
        %v235 = vmul.f32 %v213, 0.007598758
        %v236 = vmul.f32 %v215, 0.007598758
        %v237 = vmul.f32 %v216, 0.007598758
        %v238 = vmul.f32 %v217, 0.007598758
        %v239 = vmul.f32 %v219, 0.007598758
        %v240 = vmul.f32 %v220, 0.007598758
        %v241 = vmul.f32 %v221, 0.007598758
        %v242 = vmul.f32 %v203, 0.007598758
        %v243 = vmul.f32 %v204, 0.007598758
        %v244 = vmul.f32 %v205, 0.007598758
        %v245 = vmul.f32 %v207, 0.007598758
        %v246 = vmul.f32 %v208, 0.007598758
        %v247 = vmul.f32 %v209, 0.007598758
        %vm263 = vcmask 1046528
        %v264 = vrot.slane %v233, 1
        %v265 = vrot.slane %v234, 1
        %v266 = vsel %vm263, %v264, %v265
        %v267 = vrot.slane %v235, 1
        %v268 = vsel %vm263, %v265, %v267
        %v269 = vrot.slane %v236, 1
        %v270 = vrot.slane %v237, 1
        %v271 = vsel %vm263, %v269, %v270
        %v272 = vrot.slane %v238, 1
        %v273 = vsel %vm263, %v270, %v272
        %v274 = vrot.slane %v239, 1
        %v275 = vrot.slane %v240, 1
        %v276 = vsel %vm263, %v274, %v275
        %v277 = vrot.slane %v241, 1
        %v278 = vsel %vm263, %v275, %v277
        %v279 = vrot.slane %v242, 1
        %v280 = vrot.slane %v243, 1
        %v281 = vsel %vm263, %v279, %v280
        %v282 = vrot.slane %v244, 1
        %v283 = vsel %vm263, %v280, %v282
        %v284 = vrot.slane %v245, 1
        %v285 = vrot.slane %v246, 1
        %v286 = vsel %vm263, %v284, %v285
        %v287 = vrot.slane %v247, 1
        %v288 = vsel %vm263, %v285, %v287
        %v299 = vadd.f32 %v223, %v266
        %v300 = vadd.f32 %v224, %v268
        %v301 = vadd.f32 %v225, %v271
        %v302 = vadd.f32 %v226, %v273
        %v303 = vadd.f32 %v227, %v276
        %v304 = vadd.f32 %v228, %v278
        %v305 = vadd.f32 %v229, %v281
        %v306 = vadd.f32 %v230, %v283
        %v307 = vadd.f32 %v231, %v286
        %v308 = vadd.f32 %v232, %v288
        %v309 = vmul.f32 %v211, 0.036000773
        %v310 = vmul.f32 %v212, 0.036000773
        %v311 = vmul.f32 %v213, 0.036000773
        %v312 = vmul.f32 %v215, 0.036000773
        %v313 = vmul.f32 %v216, 0.036000773
        %v314 = vmul.f32 %v217, 0.036000773
        %v315 = vmul.f32 %v219, 0.036000773
        %v316 = vmul.f32 %v220, 0.036000773
        %v317 = vmul.f32 %v221, 0.036000773
        %v318 = vmul.f32 %v203, 0.036000773
        %v319 = vmul.f32 %v204, 0.036000773
        %v320 = vmul.f32 %v205, 0.036000773
        %v321 = vmul.f32 %v207, 0.036000773
        %v322 = vmul.f32 %v208, 0.036000773
        %v323 = vmul.f32 %v209, 0.036000773
        %vm339 = vcmask 1045504
        %v340 = vrot.slane %v309, 2
        %v341 = vrot.slane %v310, 2
        %v342 = vsel %vm339, %v340, %v341
        %v343 = vrot.slane %v311, 2
        %v344 = vsel %vm339, %v341, %v343
        %v345 = vrot.slane %v312, 2
        %v346 = vrot.slane %v313, 2
        %v347 = vsel %vm339, %v345, %v346
        %v348 = vrot.slane %v314, 2
        %v349 = vsel %vm339, %v346, %v348
        %v350 = vrot.slane %v315, 2
        %v351 = vrot.slane %v316, 2
        %v352 = vsel %vm339, %v350, %v351
        %v353 = vrot.slane %v317, 2
        %v354 = vsel %vm339, %v351, %v353
        %v355 = vrot.slane %v318, 2
        %v356 = vrot.slane %v319, 2
        %v357 = vsel %vm339, %v355, %v356
        %v358 = vrot.slane %v320, 2
        %v359 = vsel %vm339, %v356, %v358
        %v360 = vrot.slane %v321, 2
        %v361 = vrot.slane %v322, 2
        %v362 = vsel %vm339, %v360, %v361
        %v363 = vrot.slane %v323, 2
        %v364 = vsel %vm339, %v361, %v363
        %v375 = vadd.f32 %v299, %v342
        %v376 = vadd.f32 %v300, %v344
        %v377 = vadd.f32 %v301, %v347
        %v378 = vadd.f32 %v302, %v349
        %v379 = vadd.f32 %v303, %v352
        %v380 = vadd.f32 %v304, %v354
        %v381 = vadd.f32 %v305, %v357
        %v382 = vadd.f32 %v306, %v359
        %v383 = vadd.f32 %v307, %v362
        %v384 = vadd.f32 %v308, %v364
        %v385 = vmul.f32 %v211, 0.10936069
        %v386 = vmul.f32 %v212, 0.10936069
        %v387 = vmul.f32 %v213, 0.10936069
        %v388 = vmul.f32 %v215, 0.10936069
        %v389 = vmul.f32 %v216, 0.10936069
        %v390 = vmul.f32 %v217, 0.10936069
        %v391 = vmul.f32 %v219, 0.10936069
        %v392 = vmul.f32 %v220, 0.10936069
        %v393 = vmul.f32 %v221, 0.10936069
        %v394 = vmul.f32 %v203, 0.10936069
        %v395 = vmul.f32 %v204, 0.10936069
        %v396 = vmul.f32 %v205, 0.10936069
        %v397 = vmul.f32 %v207, 0.10936069
        %v398 = vmul.f32 %v208, 0.10936069
        %v399 = vmul.f32 %v209, 0.10936069
        %vm415 = vcmask 1044480
        %v416 = vrot.slane %v385, 3
        %v417 = vrot.slane %v386, 3
        %v418 = vsel %vm415, %v416, %v417
        %v419 = vrot.slane %v387, 3
        %v420 = vsel %vm415, %v417, %v419
        %v421 = vrot.slane %v388, 3
        %v422 = vrot.slane %v389, 3
        %v423 = vsel %vm415, %v421, %v422
        %v424 = vrot.slane %v390, 3
        %v425 = vsel %vm415, %v422, %v424
        %v426 = vrot.slane %v391, 3
        %v427 = vrot.slane %v392, 3
        %v428 = vsel %vm415, %v426, %v427
        %v429 = vrot.slane %v393, 3
        %v430 = vsel %vm415, %v427, %v429
        %v431 = vrot.slane %v394, 3
        %v432 = vrot.slane %v395, 3
        %v433 = vsel %vm415, %v431, %v432
        %v434 = vrot.slane %v396, 3
        %v435 = vsel %vm415, %v432, %v434
        %v436 = vrot.slane %v397, 3
        %v437 = vrot.slane %v398, 3
        %v438 = vsel %vm415, %v436, %v437
        %v439 = vrot.slane %v399, 3
        %v440 = vsel %vm415, %v437, %v439
        %v451 = vadd.f32 %v375, %v418
        %v452 = vadd.f32 %v376, %v420
        %v453 = vadd.f32 %v377, %v423
        %v454 = vadd.f32 %v378, %v425
        %v455 = vadd.f32 %v379, %v428
        %v456 = vadd.f32 %v380, %v430
        %v457 = vadd.f32 %v381, %v433
        %v458 = vadd.f32 %v382, %v435
        %v459 = vadd.f32 %v383, %v438
        %v460 = vadd.f32 %v384, %v440
        %v461 = vmul.f32 %v211, 0.21300554
        %v462 = vmul.f32 %v212, 0.21300554
        %v463 = vmul.f32 %v213, 0.21300554
        %v464 = vmul.f32 %v215, 0.21300554
        %v465 = vmul.f32 %v216, 0.21300554
        %v466 = vmul.f32 %v217, 0.21300554
        %v467 = vmul.f32 %v219, 0.21300554
        %v468 = vmul.f32 %v220, 0.21300554
        %v469 = vmul.f32 %v221, 0.21300554
        %v470 = vmul.f32 %v203, 0.21300554
        %v471 = vmul.f32 %v204, 0.21300554
        %v472 = vmul.f32 %v205, 0.21300554
        %v473 = vmul.f32 %v207, 0.21300554
        %v474 = vmul.f32 %v208, 0.21300554
        %v475 = vmul.f32 %v209, 0.21300554
        %vm491 = vcmask 1043456
        %v492 = vrot.slane %v461, 4
        %v493 = vrot.slane %v462, 4
        %v494 = vsel %vm491, %v492, %v493
        %v495 = vrot.slane %v463, 4
        %v496 = vsel %vm491, %v493, %v495
        %v497 = vrot.slane %v464, 4
        %v498 = vrot.slane %v465, 4
        %v499 = vsel %vm491, %v497, %v498
        %v500 = vrot.slane %v466, 4
        %v501 = vsel %vm491, %v498, %v500
        %v502 = vrot.slane %v467, 4
        %v503 = vrot.slane %v468, 4
        %v504 = vsel %vm491, %v502, %v503
        %v505 = vrot.slane %v469, 4
        %v506 = vsel %vm491, %v503, %v505
        %v507 = vrot.slane %v470, 4
        %v508 = vrot.slane %v471, 4
        %v509 = vsel %vm491, %v507, %v508
        %v510 = vrot.slane %v472, 4
        %v511 = vsel %vm491, %v508, %v510
        %v512 = vrot.slane %v473, 4
        %v513 = vrot.slane %v474, 4
        %v514 = vsel %vm491, %v512, %v513
        %v515 = vrot.slane %v475, 4
        %v516 = vsel %vm491, %v513, %v515
        %v527 = vadd.f32 %v451, %v494
        %v528 = vadd.f32 %v452, %v496
        %v529 = vadd.f32 %v453, %v499
        %v530 = vadd.f32 %v454, %v501
        %v531 = vadd.f32 %v455, %v504
        %v532 = vadd.f32 %v456, %v506
        %v533 = vadd.f32 %v457, %v509
        %v534 = vadd.f32 %v458, %v511
        %v535 = vadd.f32 %v459, %v514
        %v536 = vadd.f32 %v460, %v516
        %v537 = vmul.f32 %v211, 0.26601171
        %v538 = vmul.f32 %v212, 0.26601171
        %v539 = vmul.f32 %v213, 0.26601171
        %v540 = vmul.f32 %v215, 0.26601171
        %v541 = vmul.f32 %v216, 0.26601171
        %v542 = vmul.f32 %v217, 0.26601171
        %v543 = vmul.f32 %v219, 0.26601171
        %v544 = vmul.f32 %v220, 0.26601171
        %v545 = vmul.f32 %v221, 0.26601171
        %v546 = vmul.f32 %v203, 0.26601171
        %v547 = vmul.f32 %v204, 0.26601171
        %v548 = vmul.f32 %v205, 0.26601171
        %v549 = vmul.f32 %v207, 0.26601171
        %v550 = vmul.f32 %v208, 0.26601171
        %v551 = vmul.f32 %v209, 0.26601171
        %vm567 = vcmask 1042432
        %v568 = vrot.slane %v537, 5
        %v569 = vrot.slane %v538, 5
        %v570 = vsel %vm567, %v568, %v569
        %v571 = vrot.slane %v539, 5
        %v572 = vsel %vm567, %v569, %v571
        %v573 = vrot.slane %v540, 5
        %v574 = vrot.slane %v541, 5
        %v575 = vsel %vm567, %v573, %v574
        %v576 = vrot.slane %v542, 5
        %v577 = vsel %vm567, %v574, %v576
        %v578 = vrot.slane %v543, 5
        %v579 = vrot.slane %v544, 5
        %v580 = vsel %vm567, %v578, %v579
        %v581 = vrot.slane %v545, 5
        %v582 = vsel %vm567, %v579, %v581
        %v583 = vrot.slane %v546, 5
        %v584 = vrot.slane %v547, 5
        %v585 = vsel %vm567, %v583, %v584
        %v586 = vrot.slane %v548, 5
        %v587 = vsel %vm567, %v584, %v586
        %v588 = vrot.slane %v549, 5
        %v589 = vrot.slane %v550, 5
        %v590 = vsel %vm567, %v588, %v589
        %v591 = vrot.slane %v551, 5
        %v592 = vsel %vm567, %v589, %v591
        %v603 = vadd.f32 %v527, %v570
        %v604 = vadd.f32 %v528, %v572
        %v605 = vadd.f32 %v529, %v575
        %v606 = vadd.f32 %v530, %v577
        %v607 = vadd.f32 %v531, %v580
        %v608 = vadd.f32 %v532, %v582
        %v609 = vadd.f32 %v533, %v585
        %v610 = vadd.f32 %v534, %v587
        %v611 = vadd.f32 %v535, %v590
        %v612 = vadd.f32 %v536, %v592
        %vm613 = vcmask 1041408
        %v614 = vrot.slane %v461, 6
        %v615 = vrot.slane %v462, 6
        %v616 = vsel %vm613, %v614, %v615
        %v617 = vrot.slane %v463, 6
        %v618 = vsel %vm613, %v615, %v617
        %v619 = vrot.slane %v464, 6
        %v620 = vrot.slane %v465, 6
        %v621 = vsel %vm613, %v619, %v620
        %v622 = vrot.slane %v466, 6
        %v623 = vsel %vm613, %v620, %v622
        %v624 = vrot.slane %v467, 6
        %v625 = vrot.slane %v468, 6
        %v626 = vsel %vm613, %v624, %v625
        %v627 = vrot.slane %v469, 6
        %v628 = vsel %vm613, %v625, %v627
        %v629 = vrot.slane %v470, 6
        %v630 = vrot.slane %v471, 6
        %v631 = vsel %vm613, %v629, %v630
        %v632 = vrot.slane %v472, 6
        %v633 = vsel %vm613, %v630, %v632
        %v634 = vrot.slane %v473, 6
        %v635 = vrot.slane %v474, 6
        %v636 = vsel %vm613, %v634, %v635
        %v637 = vrot.slane %v475, 6
        %v638 = vsel %vm613, %v635, %v637
        %v649 = vadd.f32 %v603, %v616
        %v650 = vadd.f32 %v604, %v618
        %v651 = vadd.f32 %v605, %v621
        %v652 = vadd.f32 %v606, %v623
        %v653 = vadd.f32 %v607, %v626
        %v654 = vadd.f32 %v608, %v628
        %v655 = vadd.f32 %v609, %v631
        %v656 = vadd.f32 %v610, %v633
        %v657 = vadd.f32 %v611, %v636
        %v658 = vadd.f32 %v612, %v638
        %vm659 = vcmask 1040384
        %v660 = vrot.slane %v385, 7
        %v661 = vrot.slane %v386, 7
        %v662 = vsel %vm659, %v660, %v661
        %v663 = vrot.slane %v387, 7
        %v664 = vsel %vm659, %v661, %v663
        %v665 = vrot.slane %v388, 7
        %v666 = vrot.slane %v389, 7
        %v667 = vsel %vm659, %v665, %v666
        %v668 = vrot.slane %v390, 7
        %v669 = vsel %vm659, %v666, %v668
        %v670 = vrot.slane %v391, 7
        %v671 = vrot.slane %v392, 7
        %v672 = vsel %vm659, %v670, %v671
        %v673 = vrot.slane %v393, 7
        %v674 = vsel %vm659, %v671, %v673
        %v675 = vrot.slane %v394, 7
        %v676 = vrot.slane %v395, 7
        %v677 = vsel %vm659, %v675, %v676
        %v678 = vrot.slane %v396, 7
        %v679 = vsel %vm659, %v676, %v678
        %v680 = vrot.slane %v397, 7
        %v681 = vrot.slane %v398, 7
        %v682 = vsel %vm659, %v680, %v681
        %v683 = vrot.slane %v399, 7
        %v684 = vsel %vm659, %v681, %v683
        %v695 = vadd.f32 %v649, %v662
        %v696 = vadd.f32 %v650, %v664
        %v697 = vadd.f32 %v651, %v667
        %v698 = vadd.f32 %v652, %v669
        %v699 = vadd.f32 %v653, %v672
        %v700 = vadd.f32 %v654, %v674
        %v701 = vadd.f32 %v655, %v677
        %v702 = vadd.f32 %v656, %v679
        %v703 = vadd.f32 %v657, %v682
        %v704 = vadd.f32 %v658, %v684
        %v705 = vadd.f32 %v695, %v310
        %v706 = vadd.f32 %v696, %v311
        %v707 = vadd.f32 %v697, %v313
        %v708 = vadd.f32 %v698, %v314
        %v709 = vadd.f32 %v699, %v316
        %v710 = vadd.f32 %v700, %v317
        %v711 = vadd.f32 %v701, %v319
        %v712 = vadd.f32 %v702, %v320
        %v713 = vadd.f32 %v703, %v322
        %v714 = vadd.f32 %v704, %v323
        %v715 = vmul.f32 %v214, 0.007598758
        %v716 = vmul.f32 %v218, 0.007598758
        %v717 = vmul.f32 %v222, 0.007598758
        %v718 = vmul.f32 %v206, 0.007598758
        %v719 = vmul.f32 %v210, 0.007598758
        %v725 = vrot.slane %v715, 1
        %v726 = vsel %vm263, %v267, %v725
        %v727 = vrot.slane %v716, 1
        %v728 = vsel %vm263, %v272, %v727
        %v729 = vrot.slane %v717, 1
        %v730 = vsel %vm263, %v277, %v729
        %v731 = vrot.slane %v718, 1
        %v732 = vsel %vm263, %v282, %v731
        %v733 = vrot.slane %v719, 1
        %v734 = vsel %vm263, %v287, %v733
        %v740 = vadd.f32 %v705, %v268
        %v741 = vadd.f32 %v706, %v726
        %v742 = vadd.f32 %v707, %v273
        %v743 = vadd.f32 %v708, %v728
        %v744 = vadd.f32 %v709, %v278
        %v745 = vadd.f32 %v710, %v730
        %v746 = vadd.f32 %v711, %v283
        %v747 = vadd.f32 %v712, %v732
        %v748 = vadd.f32 %v713, %v288
        %v749 = vadd.f32 %v714, %v734
        %v750 = vmul.f32 %v213, 0.0010283801
        %v751 = vmul.f32 %v214, 0.0010283801
        %v752 = vmul.f32 %v217, 0.0010283801
        %v753 = vmul.f32 %v218, 0.0010283801
        %v754 = vmul.f32 %v221, 0.0010283801
        %v755 = vmul.f32 %v222, 0.0010283801
        %v756 = vmul.f32 %v205, 0.0010283801
        %v757 = vmul.f32 %v206, 0.0010283801
        %v758 = vmul.f32 %v209, 0.0010283801
        %v759 = vmul.f32 %v210, 0.0010283801
        %v775 = vrot.slane %v224, 2
        %v776 = vrot.slane %v750, 2
        %v777 = vsel %vm339, %v775, %v776
        %v778 = vrot.slane %v751, 2
        %v779 = vsel %vm339, %v776, %v778
        %v780 = vrot.slane %v226, 2
        %v781 = vrot.slane %v752, 2
        %v782 = vsel %vm339, %v780, %v781
        %v783 = vrot.slane %v753, 2
        %v784 = vsel %vm339, %v781, %v783
        %v785 = vrot.slane %v228, 2
        %v786 = vrot.slane %v754, 2
        %v787 = vsel %vm339, %v785, %v786
        %v788 = vrot.slane %v755, 2
        %v789 = vsel %vm339, %v786, %v788
        %v790 = vrot.slane %v230, 2
        %v791 = vrot.slane %v756, 2
        %v792 = vsel %vm339, %v790, %v791
        %v793 = vrot.slane %v757, 2
        %v794 = vsel %vm339, %v791, %v793
        %v795 = vrot.slane %v232, 2
        %v796 = vrot.slane %v758, 2
        %v797 = vsel %vm339, %v795, %v796
        %v798 = vrot.slane %v759, 2
        %v799 = vsel %vm339, %v796, %v798
        %v810 = vadd.f32 %v740, %v777
        %v811 = vadd.f32 %v741, %v779
        %v812 = vadd.f32 %v742, %v782
        %v813 = vadd.f32 %v743, %v784
        %v814 = vadd.f32 %v744, %v787
        %v815 = vadd.f32 %v745, %v789
        %v816 = vadd.f32 %v746, %v792
        %v817 = vadd.f32 %v747, %v794
        %v818 = vadd.f32 %v748, %v797
        %v819 = vadd.f32 %v749, %v799
        %v820 = vmul.f32 %v810, 0.0010283801
        %v821 = vmul.f32 %v811, 0.0010283801
        %v822 = vmul.f32 %v812, 0.0010283801
        %v823 = vmul.f32 %v813, 0.0010283801
        %v824 = vmul.f32 %v814, 0.0010283801
        %v825 = vmul.f32 %v815, 0.0010283801
        %v826 = vmul.f32 %v816, 0.0010283801
        %v827 = vmul.f32 %v817, 0.0010283801
        %v828 = vmul.f32 %v818, 0.0010283801
        %v829 = vmul.f32 %v819, 0.0010283801
        %v830 = vmul.f32 %v810, 0.007598758
        %v831 = vmul.f32 %v811, 0.007598758
        %v832 = vmul.f32 %v812, 0.007598758
        %v833 = vmul.f32 %v813, 0.007598758
        %v834 = vmul.f32 %v814, 0.007598758
        %v835 = vmul.f32 %v815, 0.007598758
        %v836 = vmul.f32 %v816, 0.007598758
        %v837 = vmul.f32 %v817, 0.007598758
        %v838 = vmul.f32 %v818, 0.007598758
        %v839 = vmul.f32 %v819, 0.007598758
        %850 = vrot.lane.b32.xlu0 %v830, 127
        %v851 = vpop.permute.xlu0 %850
        %852 = vrot.lane.b32.xlu0 %v831, 127
        %v853 = vpop.permute.xlu0 %852
        %854 = vrot.lane.b32.xlu0 %v832, 127
        %v855 = vpop.permute.xlu0 %854
        %856 = vrot.lane.b32.xlu0 %v833, 127
        %v857 = vpop.permute.xlu0 %856
        %858 = vrot.lane.b32.xlu0 %v834, 127
        %v859 = vpop.permute.xlu0 %858
        %860 = vrot.lane.b32.xlu0 %v835, 127
        %v861 = vpop.permute.xlu0 %860
        %862 = vrot.lane.b32.xlu0 %v836, 127
        %v863 = vpop.permute.xlu0 %862
        %864 = vrot.lane.b32.xlu0 %v837, 127
        %v865 = vpop.permute.xlu0 %864
        %866 = vrot.lane.b32.xlu0 %v838, 127
        %v867 = vpop.permute.xlu0 %866
        %868 = vrot.lane.b32.xlu0 %v839, 127
        %v869 = vpop.permute.xlu0 %868
        %v880 = vadd.f32 %v820, %v851
        %v881 = vadd.f32 %v821, %v853
        %v882 = vadd.f32 %v822, %v855
        %v883 = vadd.f32 %v823, %v857
        %v884 = vadd.f32 %v824, %v859
        %v885 = vadd.f32 %v825, %v861
        %v886 = vadd.f32 %v826, %v863
        %v887 = vadd.f32 %v827, %v865
        %v888 = vadd.f32 %v828, %v867
        %v889 = vadd.f32 %v829, %v869
        %v890 = vmul.f32 %v810, 0.036000773
        %v891 = vmul.f32 %v811, 0.036000773
        %v892 = vmul.f32 %v812, 0.036000773
        %v893 = vmul.f32 %v813, 0.036000773
        %v894 = vmul.f32 %v814, 0.036000773
        %v895 = vmul.f32 %v815, 0.036000773
        %v896 = vmul.f32 %v816, 0.036000773
        %v897 = vmul.f32 %v817, 0.036000773
        %v898 = vmul.f32 %v818, 0.036000773
        %v899 = vmul.f32 %v819, 0.036000773
        %910 = vrot.lane.b32.xlu0 %v890, 126
        %v911 = vpop.permute.xlu0 %910
        %912 = vrot.lane.b32.xlu0 %v891, 126
        %v913 = vpop.permute.xlu0 %912
        %914 = vrot.lane.b32.xlu0 %v892, 126
        %v915 = vpop.permute.xlu0 %914
        %916 = vrot.lane.b32.xlu0 %v893, 126
        %v917 = vpop.permute.xlu0 %916
        %918 = vrot.lane.b32.xlu0 %v894, 126
        %v919 = vpop.permute.xlu0 %918
        %920 = vrot.lane.b32.xlu0 %v895, 126
        %v921 = vpop.permute.xlu0 %920
        %922 = vrot.lane.b32.xlu0 %v896, 126
        %v923 = vpop.permute.xlu0 %922
        %924 = vrot.lane.b32.xlu0 %v897, 126
        %v925 = vpop.permute.xlu0 %924
        %926 = vrot.lane.b32.xlu0 %v898, 126
        %v927 = vpop.permute.xlu0 %926
        %928 = vrot.lane.b32.xlu0 %v899, 126
        %v929 = vpop.permute.xlu0 %928
        %v940 = vadd.f32 %v880, %v911
        %v941 = vadd.f32 %v881, %v913
        %v942 = vadd.f32 %v882, %v915
        %v943 = vadd.f32 %v883, %v917
        %v944 = vadd.f32 %v884, %v919
        %v945 = vadd.f32 %v885, %v921
        %v946 = vadd.f32 %v886, %v923
        %v947 = vadd.f32 %v887, %v925
        %v948 = vadd.f32 %v888, %v927
        %v949 = vadd.f32 %v889, %v929
        %v950 = vmul.f32 %v810, 0.10936069
        %v951 = vmul.f32 %v811, 0.10936069
        %v952 = vmul.f32 %v812, 0.10936069
        %v953 = vmul.f32 %v813, 0.10936069
        %v954 = vmul.f32 %v814, 0.10936069
        %v955 = vmul.f32 %v815, 0.10936069
        %v956 = vmul.f32 %v816, 0.10936069
        %v957 = vmul.f32 %v817, 0.10936069
        %v958 = vmul.f32 %v818, 0.10936069
        %v959 = vmul.f32 %v819, 0.10936069
        %970 = vrot.lane.b32.xlu0 %v950, 125
        %v971 = vpop.permute.xlu0 %970
        %972 = vrot.lane.b32.xlu0 %v951, 125
        %v973 = vpop.permute.xlu0 %972
        %974 = vrot.lane.b32.xlu0 %v952, 125
        %v975 = vpop.permute.xlu0 %974
        %976 = vrot.lane.b32.xlu0 %v953, 125
        %v977 = vpop.permute.xlu0 %976
        %978 = vrot.lane.b32.xlu0 %v954, 125
        %v979 = vpop.permute.xlu0 %978
        %980 = vrot.lane.b32.xlu0 %v955, 125
        %v981 = vpop.permute.xlu0 %980
        %982 = vrot.lane.b32.xlu0 %v956, 125
        %v983 = vpop.permute.xlu0 %982
        %984 = vrot.lane.b32.xlu0 %v957, 125
        %v985 = vpop.permute.xlu0 %984
        %986 = vrot.lane.b32.xlu0 %v958, 125
        %v987 = vpop.permute.xlu0 %986
        %988 = vrot.lane.b32.xlu0 %v959, 125
        %v989 = vpop.permute.xlu0 %988
        %v1000 = vadd.f32 %v940, %v971
        %v1001 = vadd.f32 %v941, %v973
        %v1002 = vadd.f32 %v942, %v975
        %v1003 = vadd.f32 %v943, %v977
        %v1004 = vadd.f32 %v944, %v979
        %v1005 = vadd.f32 %v945, %v981
        %v1006 = vadd.f32 %v946, %v983
        %v1007 = vadd.f32 %v947, %v985
        %v1008 = vadd.f32 %v948, %v987
        %v1009 = vadd.f32 %v949, %v989
        %v1010 = vmul.f32 %v810, 0.21300554
        %v1011 = vmul.f32 %v811, 0.21300554
        %v1012 = vmul.f32 %v812, 0.21300554
        %v1013 = vmul.f32 %v813, 0.21300554
        %v1014 = vmul.f32 %v814, 0.21300554
        %v1015 = vmul.f32 %v815, 0.21300554
        %v1016 = vmul.f32 %v816, 0.21300554
        %v1017 = vmul.f32 %v817, 0.21300554
        %v1018 = vmul.f32 %v818, 0.21300554
        %v1019 = vmul.f32 %v819, 0.21300554
        %1030 = vrot.lane.b32.xlu0 %v1010, 124
        %v1031 = vpop.permute.xlu0 %1030
        %1032 = vrot.lane.b32.xlu0 %v1011, 124
        %v1033 = vpop.permute.xlu0 %1032
        %1034 = vrot.lane.b32.xlu0 %v1012, 124
        %v1035 = vpop.permute.xlu0 %1034
        %1036 = vrot.lane.b32.xlu0 %v1013, 124
        %v1037 = vpop.permute.xlu0 %1036
        %1038 = vrot.lane.b32.xlu0 %v1014, 124
        %v1039 = vpop.permute.xlu0 %1038
        %1040 = vrot.lane.b32.xlu0 %v1015, 124
        %v1041 = vpop.permute.xlu0 %1040
        %1042 = vrot.lane.b32.xlu0 %v1016, 124
        %v1043 = vpop.permute.xlu0 %1042
        %1044 = vrot.lane.b32.xlu0 %v1017, 124
        %v1045 = vpop.permute.xlu0 %1044
        %1046 = vrot.lane.b32.xlu0 %v1018, 124
        %v1047 = vpop.permute.xlu0 %1046
        %1048 = vrot.lane.b32.xlu0 %v1019, 124
        %v1049 = vpop.permute.xlu0 %1048
        %v1060 = vadd.f32 %v1000, %v1031
        %v1061 = vadd.f32 %v1001, %v1033
        %v1062 = vadd.f32 %v1002, %v1035
        %v1063 = vadd.f32 %v1003, %v1037
        %v1064 = vadd.f32 %v1004, %v1039
        %v1065 = vadd.f32 %v1005, %v1041
        %v1066 = vadd.f32 %v1006, %v1043
        %v1067 = vadd.f32 %v1007, %v1045
        %v1068 = vadd.f32 %v1008, %v1047
        %v1069 = vadd.f32 %v1009, %v1049
        %v1070 = vmul.f32 %v810, 0.26601171
        %v1071 = vmul.f32 %v811, 0.26601171
        %v1072 = vmul.f32 %v812, 0.26601171
        %v1073 = vmul.f32 %v813, 0.26601171
        %v1074 = vmul.f32 %v814, 0.26601171
        %v1075 = vmul.f32 %v815, 0.26601171
        %v1076 = vmul.f32 %v816, 0.26601171
        %v1077 = vmul.f32 %v817, 0.26601171
        %v1078 = vmul.f32 %v818, 0.26601171
        %v1079 = vmul.f32 %v819, 0.26601171
        %1090 = vrot.lane.b32.xlu0 %v1070, 123
        %v1091 = vpop.permute.xlu0 %1090
        %1092 = vrot.lane.b32.xlu0 %v1071, 123
        %v1093 = vpop.permute.xlu0 %1092
        %1094 = vrot.lane.b32.xlu0 %v1072, 123
        %v1095 = vpop.permute.xlu0 %1094
        %1096 = vrot.lane.b32.xlu0 %v1073, 123
        %v1097 = vpop.permute.xlu0 %1096
        %1098 = vrot.lane.b32.xlu0 %v1074, 123
        %v1099 = vpop.permute.xlu0 %1098
        %1100 = vrot.lane.b32.xlu0 %v1075, 123
        %v1101 = vpop.permute.xlu0 %1100
        %1102 = vrot.lane.b32.xlu0 %v1076, 123
        %v1103 = vpop.permute.xlu0 %1102
        %1104 = vrot.lane.b32.xlu0 %v1077, 123
        %v1105 = vpop.permute.xlu0 %1104
        %1106 = vrot.lane.b32.xlu0 %v1078, 123
        %v1107 = vpop.permute.xlu0 %1106
        %1108 = vrot.lane.b32.xlu0 %v1079, 123
        %v1109 = vpop.permute.xlu0 %1108
        %v1120 = vadd.f32 %v1060, %v1091
        %v1121 = vadd.f32 %v1061, %v1093
        %v1122 = vadd.f32 %v1062, %v1095
        %v1123 = vadd.f32 %v1063, %v1097
        %v1124 = vadd.f32 %v1064, %v1099
        %v1125 = vadd.f32 %v1065, %v1101
        %v1126 = vadd.f32 %v1066, %v1103
        %v1127 = vadd.f32 %v1067, %v1105
        %v1128 = vadd.f32 %v1068, %v1107
        %v1129 = vadd.f32 %v1069, %v1109
        %1130 = vrot.lane.b32.xlu0 %v1010, 122
        %v1131 = vpop.permute.xlu0 %1130
        %1132 = vrot.lane.b32.xlu0 %v1011, 122
        %v1133 = vpop.permute.xlu0 %1132
        %1134 = vrot.lane.b32.xlu0 %v1012, 122
        %v1135 = vpop.permute.xlu0 %1134
        %1136 = vrot.lane.b32.xlu0 %v1013, 122
        %v1137 = vpop.permute.xlu0 %1136
        %1138 = vrot.lane.b32.xlu0 %v1014, 122
        %v1139 = vpop.permute.xlu0 %1138
        %1140 = vrot.lane.b32.xlu0 %v1015, 122
        %v1141 = vpop.permute.xlu0 %1140
        %1142 = vrot.lane.b32.xlu0 %v1016, 122
        %v1143 = vpop.permute.xlu0 %1142
        %1144 = vrot.lane.b32.xlu0 %v1017, 122
        %v1145 = vpop.permute.xlu0 %1144
        %1146 = vrot.lane.b32.xlu0 %v1018, 122
        %v1147 = vpop.permute.xlu0 %1146
        %1148 = vrot.lane.b32.xlu0 %v1019, 122
        %v1149 = vpop.permute.xlu0 %1148
        %v1160 = vadd.f32 %v1120, %v1131
        %v1161 = vadd.f32 %v1121, %v1133
        %v1162 = vadd.f32 %v1122, %v1135
        %v1163 = vadd.f32 %v1123, %v1137
        %v1164 = vadd.f32 %v1124, %v1139
        %v1165 = vadd.f32 %v1125, %v1141
        %v1166 = vadd.f32 %v1126, %v1143
        %v1167 = vadd.f32 %v1127, %v1145
        %v1168 = vadd.f32 %v1128, %v1147
        %v1169 = vadd.f32 %v1129, %v1149
        %1170 = vrot.lane.b32.xlu0 %v950, 121
        %v1171 = vpop.permute.xlu0 %1170
        %1172 = vrot.lane.b32.xlu0 %v951, 121
        %v1173 = vpop.permute.xlu0 %1172
        %1174 = vrot.lane.b32.xlu0 %v952, 121
        %v1175 = vpop.permute.xlu0 %1174
        %1176 = vrot.lane.b32.xlu0 %v953, 121
        %v1177 = vpop.permute.xlu0 %1176
        %1178 = vrot.lane.b32.xlu0 %v954, 121
        %v1179 = vpop.permute.xlu0 %1178
        %1180 = vrot.lane.b32.xlu0 %v955, 121
        %v1181 = vpop.permute.xlu0 %1180
        %1182 = vrot.lane.b32.xlu0 %v956, 121
        %v1183 = vpop.permute.xlu0 %1182
        %1184 = vrot.lane.b32.xlu0 %v957, 121
        %v1185 = vpop.permute.xlu0 %1184
        %1186 = vrot.lane.b32.xlu0 %v958, 121
        %v1187 = vpop.permute.xlu0 %1186
        %1188 = vrot.lane.b32.xlu0 %v959, 121
        %v1189 = vpop.permute.xlu0 %1188
        %v1200 = vadd.f32 %v1160, %v1171
        %v1201 = vadd.f32 %v1161, %v1173
        %v1202 = vadd.f32 %v1162, %v1175
        %v1203 = vadd.f32 %v1163, %v1177
        %v1204 = vadd.f32 %v1164, %v1179
        %v1205 = vadd.f32 %v1165, %v1181
        %v1206 = vadd.f32 %v1166, %v1183
        %v1207 = vadd.f32 %v1167, %v1185
        %v1208 = vadd.f32 %v1168, %v1187
        %v1209 = vadd.f32 %v1169, %v1189
        %1210 = vrot.lane.b32.xlu0 %v890, 120
        %v1211 = vpop.permute.xlu0 %1210
        %1212 = vrot.lane.b32.xlu0 %v891, 120
        %v1213 = vpop.permute.xlu0 %1212
        %1214 = vrot.lane.b32.xlu0 %v892, 120
        %v1215 = vpop.permute.xlu0 %1214
        %1216 = vrot.lane.b32.xlu0 %v893, 120
        %v1217 = vpop.permute.xlu0 %1216
        %1218 = vrot.lane.b32.xlu0 %v894, 120
        %v1219 = vpop.permute.xlu0 %1218
        %1220 = vrot.lane.b32.xlu0 %v895, 120
        %v1221 = vpop.permute.xlu0 %1220
        %1222 = vrot.lane.b32.xlu0 %v896, 120
        %v1223 = vpop.permute.xlu0 %1222
        %1224 = vrot.lane.b32.xlu0 %v897, 120
        %v1225 = vpop.permute.xlu0 %1224
        %1226 = vrot.lane.b32.xlu0 %v898, 120
        %v1227 = vpop.permute.xlu0 %1226
        %1228 = vrot.lane.b32.xlu0 %v899, 120
        %v1229 = vpop.permute.xlu0 %1228
        %v1240 = vadd.f32 %v1200, %v1211
        %v1241 = vadd.f32 %v1201, %v1213
        %v1242 = vadd.f32 %v1202, %v1215
        %v1243 = vadd.f32 %v1203, %v1217
        %v1244 = vadd.f32 %v1204, %v1219
        %v1245 = vadd.f32 %v1205, %v1221
        %v1246 = vadd.f32 %v1206, %v1223
        %v1247 = vadd.f32 %v1207, %v1225
        %v1248 = vadd.f32 %v1208, %v1227
        %v1249 = vadd.f32 %v1209, %v1229
        %1250 = vrot.lane.b32.xlu0 %v830, 119
        %v1251 = vpop.permute.xlu0 %1250
        %1252 = vrot.lane.b32.xlu0 %v831, 119
        %v1253 = vpop.permute.xlu0 %1252
        %1254 = vrot.lane.b32.xlu0 %v832, 119
        %v1255 = vpop.permute.xlu0 %1254
        %1256 = vrot.lane.b32.xlu0 %v833, 119
        %v1257 = vpop.permute.xlu0 %1256
        %1258 = vrot.lane.b32.xlu0 %v834, 119
        %v1259 = vpop.permute.xlu0 %1258
        %1260 = vrot.lane.b32.xlu0 %v835, 119
        %v1261 = vpop.permute.xlu0 %1260
        %1262 = vrot.lane.b32.xlu0 %v836, 119
        %v1263 = vpop.permute.xlu0 %1262
        %1264 = vrot.lane.b32.xlu0 %v837, 119
        %v1265 = vpop.permute.xlu0 %1264
        %1266 = vrot.lane.b32.xlu0 %v838, 119
        %v1267 = vpop.permute.xlu0 %1266
        %1268 = vrot.lane.b32.xlu0 %v839, 119
        %v1269 = vpop.permute.xlu0 %1268
        %v1280 = vadd.f32 %v1240, %v1251
        %v1281 = vadd.f32 %v1241, %v1253
        %v1282 = vadd.f32 %v1242, %v1255
        %v1283 = vadd.f32 %v1243, %v1257
        %v1284 = vadd.f32 %v1244, %v1259
        %v1285 = vadd.f32 %v1245, %v1261
        %v1286 = vadd.f32 %v1246, %v1263
        %v1287 = vadd.f32 %v1247, %v1265
        %v1288 = vadd.f32 %v1248, %v1267
        %v1289 = vadd.f32 %v1249, %v1269
        %1300 = vrot.lane.b32.xlu0 %v820, 118
        %v1301 = vpop.permute.xlu0 %1300
        %1302 = vrot.lane.b32.xlu0 %v821, 118
        %v1303 = vpop.permute.xlu0 %1302
        %1304 = vrot.lane.b32.xlu0 %v822, 118
        %v1305 = vpop.permute.xlu0 %1304
        %1306 = vrot.lane.b32.xlu0 %v823, 118
        %v1307 = vpop.permute.xlu0 %1306
        %1308 = vrot.lane.b32.xlu0 %v824, 118
        %v1309 = vpop.permute.xlu0 %1308
        %1310 = vrot.lane.b32.xlu0 %v825, 118
        %v1311 = vpop.permute.xlu0 %1310
        %1312 = vrot.lane.b32.xlu0 %v826, 118
        %v1313 = vpop.permute.xlu0 %1312
        %1314 = vrot.lane.b32.xlu0 %v827, 118
        %v1315 = vpop.permute.xlu0 %1314
        %1316 = vrot.lane.b32.xlu0 %v828, 118
        %v1317 = vpop.permute.xlu0 %1316
        %1318 = vrot.lane.b32.xlu0 %v829, 118
        %v1319 = vpop.permute.xlu0 %1318
        %v1330 = vadd.f32 %v1280, %v1301
        %v1331 = vadd.f32 %v1281, %v1303
        %v1332 = vadd.f32 %v1282, %v1305
        %v1333 = vadd.f32 %v1283, %v1307
        %v1334 = vadd.f32 %v1284, %v1309
        %v1335 = vadd.f32 %v1285, %v1311
        %v1336 = vadd.f32 %v1286, %v1313
        %v1337 = vadd.f32 %v1287, %v1315
        %v1338 = vadd.f32 %v1288, %v1317
        %v1339 = vadd.f32 %v1289, %v1319
        %v1340 = vmul.f32 %v1336, %v1336
        %v1341 = vmul.f32 %v1337, %v1337
        %v1342 = vmul.f32 %v1338, %v1338
        %v1343 = vmul.f32 %v1339, %v1339
        %v1344 = vmul.f32 %v1336, %v1338
        %v1345 = vmul.f32 %v1337, %v1339
        %v1346 = vsub.f32 %v1330, %v1340
        %v1347 = vsub.f32 %v1331, %v1341
        %v1348 = vsub.f32 %v1332, %v1342
        %v1349 = vsub.f32 %v1333, %v1343
        %v1350 = vsub.f32 %v1334, %v1344
        %v1351 = vsub.f32 %v1335, %v1345
        %v1352 = vmul.f32 %v1344, 2.0
        %v1353 = vmul.f32 %v1345, 2.0
        %v1354 = vadd.f32 %v1352, 0.0001
        %v1355 = vadd.f32 %v1353, 0.0001
        %v1356 = vmul.f32 %v1350, 2.0
        %v1357 = vmul.f32 %v1351, 2.0
        %v1358 = vadd.f32 %v1356, 0.0009
        %v1359 = vadd.f32 %v1357, 0.0009
        %v1360 = vmul.f32 %v1354, %v1358
        %v1361 = vmul.f32 %v1355, %v1359
        %v1362 = vadd.f32 %v1340, %v1342
        %v1363 = vadd.f32 %v1341, %v1343
        %v1364 = vadd.f32 %v1362, 0.0001
        %v1365 = vadd.f32 %v1363, 0.0001
        %v1366 = vadd.f32 %v1346, %v1348
        %v1367 = vadd.f32 %v1347, %v1349
        %v1368 = vadd.f32 %v1366, 0.0009
        %v1369 = vadd.f32 %v1367, 0.0009
        %v1370 = vmul.f32 %v1364, %v1368
        %v1371 = vmul.f32 %v1365, %v1369
        %v1372 = vrcp.pop %v1370
        %v1373 = vmul.f32 %v1360, %v1372
        %v1374 = vrcp.pop %v1371
        %v1375 = vmul.f32 %v1361, %v1374
        %v1376 = vlaneseq
        %v1377 = vshrl.u32 %v1376, 7
        %v1378 = vadd.s32 %v1377, 8
        %s1379 = smul.u32 %s21, 16
        %v1380 = vstv %s1379
        %v1381 = vadd.s32 %v1377, %v1380
        %v1382 = vadd.s32 %v1378, %v1380
        %vm1383 = vcmp.lt.s32.totalorder %v1381, 16
        %vm1384 = vcmp.lt.s32.totalorder %v1382, 16
        %v1385 = vsub.f32 %v203, %v207
        %v1386 = vsub.f32 %v204, %v208
        %v1387 = vsub.f32 %v205, %v209
        %v1388 = vand.u32 2147483647, %v1385
        %v1389 = vand.u32 2147483647, %v1386
        %v1390 = vand.u32 2147483647, %v1387
        %v1394 = vrot.slane %v1388, 5
        %v1395 = vrot.slane %v1389, 5
        %v1396 = vsel %vm567, %v1394, %v1395
        %v1397 = vrot.slane %v1390, 5
        %v1398 = vsel %vm567, %v1395, %v1397
        %1399 = vrot.lane.b32.xlu0 %v1396, 123
        %v1400 = vpop.permute.xlu0 %1399
        %1401 = vrot.lane.b32.xlu0 %v1398, 123
        %v1402 = vpop.permute.xlu0 %1401
        %v1405 = vsel %vm1383, %v1400, 0.0
        %v1406 = vsel %vm1384, %v1402, 0.0
        %vm1407 = vcmask 130048
        %v1408 = vsel %vm1407, %v1405, 0.0
        %v1409 = vsel %vm1407, %v1406, 0.0
        %v1410 = vadd.f32 %v1408, %v1409
        %1411 = vadd.xlane.f32.xlu0 %v1410
        %v1412 = vpop.xlane.xlu0 %1411
        %v1413 = vrot.slane %v1412, 4
        %v1414 = vadd.f32 %v1412, %v1413
        %v1415 = vrot.slane %v1414, 2
        %v1416 = vadd.f32 %v1414, %v1415
        %v1417 = vrot.slane %v1416, 1
        %v1418 = vadd.f32 %v1416, %v1417
        %s1419 = vtos %v1418
        %v1420 = vsel %vm1383, %v1373, 0.0
        %v1421 = vsel %vm1384, %v1375, 0.0
        %v1422 = vsel %vm1407, %v1420, 0.0
        %v1423 = vsel %vm1407, %v1421, 0.0
        %v1424 = vadd.f32 %v1422, %v1423
        %1425 = vadd.xlane.f32.xlu0 %v1424
        %v1426 = vpop.xlane.xlu0 %1425
        %v1427 = vrot.slane %v1426, 4
        %v1428 = vadd.f32 %v1426, %v1427
        %v1429 = vrot.slane %v1428, 2
        %v1430 = vadd.f32 %v1428, %v1429
        %v1431 = vrot.slane %v1430, 1
        %v1432 = vadd.f32 %v1430, %v1431
        %s1433 = vtos %v1432
        %v1434 = vlaneseq
        %v1435 = vand.u32 %v1434, 127
        %vm1436 = vcmp.eq.s32.totalorder %v1435, 0
        %vm1437 = vcmp.eq.s32.totalorder %v1435, 1
        %v1438 = vstv %s1433
        %v1439 = vsel %vm1437, %v1438, 0.0
        %v1440 = vstv %s1419
        %v1441 = vsel %vm1436, %v1440, %v1439
        %1442 = vst [vmem:[%s184] sm:$0x1] %v1441
        %s1443 = sand.u32 %s94, 1
        %s1444 = scalar_lea.sflag [#allocation3], %s1443
        %s1445 = sand.u32 %s94, 1
        %s1446 = scalar_lea.vmem [#allocation2], %s1445
        // Predicated region
        $region29: #{tpu_custom_call.1} parent=27 // pred_check
          %p1447 = pneg %p104
        $region30: #{tpu_custom_call.1} parent=27 // pred_check_branch
          %1449 = sbr.rel (%p1447) target = $region32
        $region31: #{tpu_custom_call.1} parent=27 // pred_region
          %s1451 = ssub.s32 16, 16
          %1452 = vsyncadd %s1444, %s1451
          %s1453 = sadd.s32 %s21, %s20
          %s1454 = smul.addr %s1453, 16
          %s1455 = scalar_lea.hbm %s2, %s1454
          %s1457 = sshll.u32 %s1446, 4
          %s1458 = int_to_ptr.vmem [resolvable:$true] %s1457
          %1460 = dma.vmem_to_hbm [thread:$0]  %s1458, 16, %s1455, %s1444
        $region32: #{tpu_custom_call.1} parent=27 // pred_fallthru
          _
      $region28: #{tpu_custom_call.1} parent=5 // pred_fallthru
        _
      %p1461 = scmp.le.s32.totalorder 2, %s11
      // Predicated region
      $region33: #{tpu_custom_call.1} parent=5 // pred_check
        %p1462 = pneg %p1461
      $region34: #{tpu_custom_call.1} parent=5 // pred_check_branch
        %1464 = sbr.rel (%p1462) target = $region36
      $region35: #{tpu_custom_call.1} parent=5 // pred_region
        %s1465 = ssub.s32 %s11, 2
        // Predicated region
        $region37: #{tpu_custom_call.1} parent=35 // pred_check
          %p1466 = pneg %p110
        $region38: #{tpu_custom_call.1} parent=35 // pred_check_branch
          %1468 = sbr.rel (%p1466) target = $region40
        $region39: #{tpu_custom_call.1} parent=35 // pred_region
          %s1469 = sand.u32 %s95, 1
          %s1470 = scalar_lea.sflag [#allocation3], %s1469
          %s1471 = sand.u32 %s95, 1
          %s1472 = scalar_lea.vmem [#allocation2], %s1471
          %1473 = dma.done %s1470, 16
        $region40: #{tpu_custom_call.1} parent=35 // pred_fallthru
          _
      $region36: #{tpu_custom_call.1} parent=5 // pred_fallthru
        _
    $region6: #{tpu_custom_call.1} parent=1 // loop_footer
      %s15 = sadd.s32 1, %s11
    $region7: #{tpu_custom_call.1} parent=1 // loop_footer_branch
      %10 = sbr.rel target = $region3
    $region8: #{tpu_custom_call.1} parent=1 // loop_exit
      _
    %1474 = vsyncpa [#allocation3], 1
    %s1475 = scalar_lea.sflag [#allocation3], 1
    %1476 = vsyncpa %s1475, 1

</llo_original>
